<compile_context>
chip_gen: v7x
topology: tpu7x:2x2x1
jax: 0.10.0
libtpu: 0.0.40
codegen_flags: <defaults>
</compile_context>

<pallas_src>
import functools
import math

import jax
import jax.numpy as jnp
from jax.experimental import pallas as pl
from jax.experimental.pallas import tpu as pltpu

CHANNEL_EPSILON = 1e-5
_LANE = 128
_TARGET_TILE_BYTES = 1 << 20  # ~1 MiB (f32) per input tile


def _hash32(x):
    """lowbias32 finalizer: full-avalanche 32-bit mix (uint32 in / uint32 out)."""
    x = x ^ (x >> 16)
    x = x * jnp.uint32(0x7FEB352D)
    x = x ^ (x >> 15)
    x = x * jnp.uint32(0x846CA68B)
    x = x ^ (x >> 16)
    return x


def _bits_to_open_unit(bits_u32):
    """uint32 random bits -> uniform float32 in the open interval (0, 1)."""
    b24 = jax.lax.bitcast_convert_type(bits_u32 >> 8, jnp.int32)  # [0, 2^24)
    return (b24.astype(jnp.float32) + 0.5) * jnp.float32(1.0 / (1 << 24))


def _erfinv_f32(x):
    """Giles' single-precision erfinv approximation, valid for |x| < 1."""
    w = -jnp.log((1.0 - x) * (1.0 + x))
    # central branch (w < 5)
    wc = w - 2.5
    p = jnp.float32(2.81022636e-08)
    for c in (3.43273939e-07, -3.5233877e-06, -4.39150654e-06, 0.00021858087,
              -0.00125372503, -0.00417768164, 0.246640727, 1.50140941):
        p = jnp.float32(c) + p * wc
    # tail branch (w >= 5)
    wt = jnp.sqrt(w) - 3.0
    q = jnp.float32(-0.000200214257)
    for c in (0.000100950558, 0.00134934322, -0.00367342844, 0.00573950773,
              -0.0076224613, 0.00943887047, 1.00167406, 2.83297682):
        q = jnp.float32(c) + q * wt
    return jnp.where(w < 5.0, p, q) * x


def _std_normal(bits_u32):
    """uint32 bits -> standard normal float32 via the inverse normal CDF."""
    u = _bits_to_open_unit(bits_u32)                      # (0, 1)
    return jnp.float32(math.sqrt(2.0)) * _erfinv_f32(2.0 * u - 1.0)


def _rayleigh_kernel(seed_ref, x_ref, o_ref, *, sigma, eps, use_approx_recip):
    tile_rows, width = x_ref.shape

    # Global element index of every lane in this tile (tiling-independent stream).
    row0 = pl.program_id(0) * tile_rows
    r_iota = jax.lax.broadcasted_iota(jnp.int32, (tile_rows, width), 0)
    c_iota = jax.lax.broadcasted_iota(jnp.int32, (tile_rows, width), 1)
    idx = (r_iota + row0) * width + c_iota                # int32 linear index

    # Counter-based PRNG: mix the seed into the counter, one shared avalanche round,
    # then two cheap decorrelated sub-streams (h-bits / noise-bits).
    mixed = idx + seed_ref[0] * jnp.int32(0x61C88647)     # wraps, fine
    ctr = jax.lax.bitcast_convert_type(mixed, jnp.uint32)
    h0 = _hash32(ctr)
    h_bits = _hash32(h0 ^ jnp.uint32(0xA511E9B3))
    n_bits = _hash32(h0 ^ jnp.uint32(0x63D83595))

    h = _std_normal(h_bits)                               # fading gain ~ N(0, 1)
    noise = jnp.float32(sigma) * _std_normal(n_bits)      # AWGN ~ N(0, sigma^2)

    x = x_ref[...].astype(jnp.float32)
    num = h * x + noise
    den = h + jnp.float32(eps)
    if use_approx_recip:
        out = num * pl.reciprocal(den, approx=True)       # EUP vrcp on real TPU
    else:
        out = num / den                                   # portable fallback
    o_ref[...] = out.astype(o_ref.dtype)


def fast_channel(x, snr_db=10.0, *, seed=0, channel_epsilon=CHANNEL_EPSILON):
    """JAX/Pallas equivalent of FastChannel.forward(x, snr_db)."""
    sigma = math.sqrt(1.0 / (2.0 * 10.0 ** (snr_db / 10.0)))

    orig_shape = x.shape
    n = int(x.size)

    # Lane-dense 2-D view: prefer a wide last dim (unmasked full-width stores, long DMA
    # descriptors); fall back to narrower widths that divide numel so the reshape stays
    # a free view (no pad copy).
    width = next((w for w in (1024, 512, 256, _LANE) if n % w == 0), None)
    pad = 0
    if width is None:
        width = _LANE
        pad = (-n) % _LANE  # TODO(synk): ragged numel costs one extra HBM round-trip

    flat = x.reshape(-1)
    if pad:
        flat = jnp.pad(flat, (0, pad))
    rows = flat.shape[0] // width
    x2d = flat.reshape(rows, width)

    # Row tiling: ~1 MiB of f32 per tile, tile rows aligned to 16 (sublane-safe for f32
    # and bf16); small inputs run as a single full-extent block.
    cap = max(16, ((_TARGET_TILE_BYTES // (width * 4)) // 16) * 16)
    tile_rows = rows if rows <= cap else cap
    grid = pl.cdiv(rows, tile_rows)

    seed_arr = jnp.asarray([seed], dtype=jnp.int32)
    use_approx_recip = jax.default_backend() == "tpu"

    kernel = functools.partial(
        _rayleigh_kernel,
        sigma=float(sigma),
        eps=float(channel_epsilon),
        use_approx_recip=use_approx_recip,
    )

    out2d = pl.pallas_call(
        kernel,
        out_shape=jax.ShapeDtypeStruct((rows, width), x.dtype),
        grid_spec=pltpu.PrefetchScalarGridSpec(
            num_scalar_prefetch=1,
            grid=(grid,),
            in_specs=[pl.BlockSpec((tile_rows, width), lambda i, seed: (i, 0))],
            out_specs=pl.BlockSpec((tile_rows, width), lambda i, seed: (i, 0)),
        ),
        compiler_params=pltpu.CompilerParams(
            dimension_semantics=("parallel",),
            vmem_limit_bytes=32 * 1024 * 1024,
        ),
    )(seed_arr, x2d)

    out = out2d.reshape(-1)
    if pad:
        out = out[:n]
    return out.reshape(orig_shape)


if __name__ == "__main__":
    key = jax.random.PRNGKey(0)
    # Small NCHW input consistent with a conv-style feature map.
    x = jax.random.normal(key, (2, 4, 16, 16), dtype=jnp.float32)

    y = fast_channel(x, snr_db=10.0, seed=0)
    y = jax.block_until_ready(y)

    assert y.shape == x.shape and y.dtype == x.dtype
    assert bool(jnp.all(jnp.isfinite(y)))
    assert not bool(jnp.allclose(y, x))  # channel actually perturbed the input
    print("KERNEL_OK")
</pallas_src>

<mosaic_0001>
module attributes {stable_mosaic.version = 11 : i64} {
  func.func @_rayleigh_kernel(%arg0: i32, %arg1: memref<1xi32, #tpu.memory_space<smem>>, %arg2: memref<2x1024xf32, #tpu.memory_space<vmem>>, %arg3: memref<2x1024xf32, #tpu.memory_space<vmem>>) attributes {dimension_semantics = [#tpu.dimension_semantics<parallel>], iteration_bounds = array<i64: 1>, scalar_prefetch = 1 : i64, scratch_operands = 0 : i64, tpu.core_type = #tpu.core_type<tc>, window_params = [{transform_indices = @transform_0, window_bounds = array<i64: 2, 1024>}, {transform_indices = @transform_1, window_bounds = array<i64: 2, 1024>}]} {
    %c2_i32 = arith.constant 2 : i32
    %0 = arith.muli %arg0, %c2_i32 : i32
    %1 = tpu.iota {dimensions = array<i32: 0>} : vector<2x1024xi32>
    %2 = tpu.iota {dimensions = array<i32: 1>} : vector<2x1024xi32>
    %3 = vector.broadcast %0 : i32 to vector<2x1024xi32>
    %4 = arith.addi %1, %3 : vector<2x1024xi32>
    %c1024_i32 = arith.constant 1024 : i32
    %5 = vector.broadcast %c1024_i32 : i32 to vector<2x1024xi32>
    %6 = arith.muli %4, %5 : vector<2x1024xi32>
    %7 = arith.addi %6, %2 : vector<2x1024xi32>
    %c0 = arith.constant 0 : index
    %8 = memref.load %arg1[%c0] : memref<1xi32, #tpu.memory_space<smem>>
    %c1640531527_i32 = arith.constant 1640531527 : i32
    %9 = arith.muli %8, %c1640531527_i32 : i32
    %10 = vector.broadcast %9 : i32 to vector<2x1024xi32>
    %11 = arith.addi %7, %10 : vector<2x1024xi32>
    %12 = tpu.bitcast %11 : vector<2x1024xi32> -> vector<2x1024xi32>
    %c16_i32 = arith.constant 16 : i32
    %13 = vector.broadcast %c16_i32 : i32 to vector<2x1024xi32>
    %14 = arith.shrui %12, %13 : vector<2x1024xi32>
    %15 = arith.xori %12, %14 : vector<2x1024xi32>
    %c2146121005_i32 = arith.constant 2146121005 : i32
    %16 = vector.broadcast %c2146121005_i32 : i32 to vector<2x1024xi32>
    %17 = arith.muli %15, %16 : vector<2x1024xi32>
    %c15_i32 = arith.constant 15 : i32
    %18 = vector.broadcast %c15_i32 : i32 to vector<2x1024xi32>
    %19 = arith.shrui %17, %18 : vector<2x1024xi32>
    %20 = arith.xori %17, %19 : vector<2x1024xi32>
    %c-2073254261_i32 = arith.constant -2073254261 : i32
    %21 = vector.broadcast %c-2073254261_i32 : i32 to vector<2x1024xi32>
    %22 = arith.muli %20, %21 : vector<2x1024xi32>
    %c16_i32_0 = arith.constant 16 : i32
    %23 = vector.broadcast %c16_i32_0 : i32 to vector<2x1024xi32>
    %24 = arith.shrui %22, %23 : vector<2x1024xi32>
    %25 = arith.xori %22, %24 : vector<2x1024xi32>
    %c-1525552717_i32 = arith.constant -1525552717 : i32
    %26 = vector.broadcast %c-1525552717_i32 : i32 to vector<2x1024xi32>
    %27 = arith.xori %25, %26 : vector<2x1024xi32>
    %c16_i32_1 = arith.constant 16 : i32
    %28 = vector.broadcast %c16_i32_1 : i32 to vector<2x1024xi32>
    %29 = arith.shrui %27, %28 : vector<2x1024xi32>
    %30 = arith.xori %27, %29 : vector<2x1024xi32>
    %c2146121005_i32_2 = arith.constant 2146121005 : i32
    %31 = vector.broadcast %c2146121005_i32_2 : i32 to vector<2x1024xi32>
    %32 = arith.muli %30, %31 : vector<2x1024xi32>
    %c15_i32_3 = arith.constant 15 : i32
    %33 = vector.broadcast %c15_i32_3 : i32 to vector<2x1024xi32>
    %34 = arith.shrui %32, %33 : vector<2x1024xi32>
    %35 = arith.xori %32, %34 : vector<2x1024xi32>
    %c-2073254261_i32_4 = arith.constant -2073254261 : i32
    %36 = vector.broadcast %c-2073254261_i32_4 : i32 to vector<2x1024xi32>
    %37 = arith.muli %35, %36 : vector<2x1024xi32>
    %c16_i32_5 = arith.constant 16 : i32
    %38 = vector.broadcast %c16_i32_5 : i32 to vector<2x1024xi32>
    %39 = arith.shrui %37, %38 : vector<2x1024xi32>
    %40 = arith.xori %37, %39 : vector<2x1024xi32>
    %c1675113877_i32 = arith.constant 1675113877 : i32
    %41 = vector.broadcast %c1675113877_i32 : i32 to vector<2x1024xi32>
    %42 = arith.xori %25, %41 : vector<2x1024xi32>
    %c16_i32_6 = arith.constant 16 : i32
    %43 = vector.broadcast %c16_i32_6 : i32 to vector<2x1024xi32>
    %44 = arith.shrui %42, %43 : vector<2x1024xi32>
    %45 = arith.xori %42, %44 : vector<2x1024xi32>
    %c2146121005_i32_7 = arith.constant 2146121005 : i32
    %46 = vector.broadcast %c2146121005_i32_7 : i32 to vector<2x1024xi32>
    %47 = arith.muli %45, %46 : vector<2x1024xi32>
    %c15_i32_8 = arith.constant 15 : i32
    %48 = vector.broadcast %c15_i32_8 : i32 to vector<2x1024xi32>
    %49 = arith.shrui %47, %48 : vector<2x1024xi32>
    %50 = arith.xori %47, %49 : vector<2x1024xi32>
    %c-2073254261_i32_9 = arith.constant -2073254261 : i32
    %51 = vector.broadcast %c-2073254261_i32_9 : i32 to vector<2x1024xi32>
    %52 = arith.muli %50, %51 : vector<2x1024xi32>
    %c16_i32_10 = arith.constant 16 : i32
    %53 = vector.broadcast %c16_i32_10 : i32 to vector<2x1024xi32>
    %54 = arith.shrui %52, %53 : vector<2x1024xi32>
    %55 = arith.xori %52, %54 : vector<2x1024xi32>
    %c8_i32 = arith.constant 8 : i32
    %56 = vector.broadcast %c8_i32 : i32 to vector<2x1024xi32>
    %57 = arith.shrui %40, %56 : vector<2x1024xi32>
    %58 = tpu.bitcast %57 : vector<2x1024xi32> -> vector<2x1024xi32>
    %59 = arith.sitofp %58 : vector<2x1024xi32> to vector<2x1024xf32>
    %cst = arith.constant 5.000000e-01 : f32
    %60 = vector.broadcast %cst : f32 to vector<2x1024xf32>
    %61 = arith.addf %59, %60 : vector<2x1024xf32>
    %cst_11 = arith.constant 5.96046448E-8 : f32
    %62 = vector.broadcast %cst_11 : f32 to vector<2x1024xf32>
    %63 = arith.mulf %61, %62 : vector<2x1024xf32>
    %cst_12 = arith.constant 2.000000e+00 : f32
    %64 = vector.broadcast %cst_12 : f32 to vector<2x1024xf32>
    %65 = arith.mulf %64, %63 : vector<2x1024xf32>
    %cst_13 = arith.constant 1.000000e+00 : f32
    %66 = vector.broadcast %cst_13 : f32 to vector<2x1024xf32>
    %67 = arith.subf %65, %66 : vector<2x1024xf32>
    %cst_14 = arith.constant 1.000000e+00 : f32
    %68 = vector.broadcast %cst_14 : f32 to vector<2x1024xf32>
    %69 = arith.subf %68, %67 : vector<2x1024xf32>
    %cst_15 = arith.constant 1.000000e+00 : f32
    %70 = vector.broadcast %cst_15 : f32 to vector<2x1024xf32>
    %71 = arith.addf %70, %67 : vector<2x1024xf32>
    %72 = arith.mulf %69, %71 : vector<2x1024xf32>
    %73 = math.log %72 : vector<2x1024xf32>
    %cst_16 = arith.constant 0.000000e+00 : f32
    %74 = vector.broadcast %cst_16 : f32 to vector<2x1024xf32>
    %75 = arith.subf %74, %73 : vector<2x1024xf32>
    %cst_17 = arith.constant 2.500000e+00 : f32
    %76 = vector.broadcast %cst_17 : f32 to vector<2x1024xf32>
    %77 = arith.subf %75, %76 : vector<2x1024xf32>
    %cst_18 = arith.constant 2.81022636E-8 : f32
    %78 = vector.broadcast %cst_18 : f32 to vector<2x1024xf32>
    %79 = arith.mulf %78, %77 : vector<2x1024xf32>
    %cst_19 = arith.constant 3.43273939E-7 : f32
    %80 = vector.broadcast %cst_19 : f32 to vector<2x1024xf32>
    %81 = arith.addf %80, %79 : vector<2x1024xf32>
    %82 = arith.mulf %81, %77 : vector<2x1024xf32>
    %cst_20 = arith.constant -3.5233877E-6 : f32
    %83 = vector.broadcast %cst_20 : f32 to vector<2x1024xf32>
    %84 = arith.addf %83, %82 : vector<2x1024xf32>
    %85 = arith.mulf %84, %77 : vector<2x1024xf32>
    %cst_21 = arith.constant -4.39150654E-6 : f32
    %86 = vector.broadcast %cst_21 : f32 to vector<2x1024xf32>
    %87 = arith.addf %86, %85 : vector<2x1024xf32>
    %88 = arith.mulf %87, %77 : vector<2x1024xf32>
    %cst_22 = arith.constant 2.1858087E-4 : f32
    %89 = vector.broadcast %cst_22 : f32 to vector<2x1024xf32>
    %90 = arith.addf %89, %88 : vector<2x1024xf32>
    %91 = arith.mulf %90, %77 : vector<2x1024xf32>
    %cst_23 = arith.constant -0.00125372503 : f32
    %92 = vector.broadcast %cst_23 : f32 to vector<2x1024xf32>
    %93 = arith.addf %92, %91 : vector<2x1024xf32>
    %94 = arith.mulf %93, %77 : vector<2x1024xf32>
    %cst_24 = arith.constant -0.00417768164 : f32
    %95 = vector.broadcast %cst_24 : f32 to vector<2x1024xf32>
    %96 = arith.addf %95, %94 : vector<2x1024xf32>
    %97 = arith.mulf %96, %77 : vector<2x1024xf32>
    %cst_25 = arith.constant 0.246640727 : f32
    %98 = vector.broadcast %cst_25 : f32 to vector<2x1024xf32>
    %99 = arith.addf %98, %97 : vector<2x1024xf32>
    %100 = arith.mulf %99, %77 : vector<2x1024xf32>
    %cst_26 = arith.constant 1.50140941 : f32
    %101 = vector.broadcast %cst_26 : f32 to vector<2x1024xf32>
    %102 = arith.addf %101, %100 : vector<2x1024xf32>
    %103 = math.sqrt %75 : vector<2x1024xf32>
    %cst_27 = arith.constant 3.000000e+00 : f32
    %104 = vector.broadcast %cst_27 : f32 to vector<2x1024xf32>
    %105 = arith.subf %103, %104 : vector<2x1024xf32>
    %cst_28 = arith.constant -2.00214257E-4 : f32
    %106 = vector.broadcast %cst_28 : f32 to vector<2x1024xf32>
    %107 = arith.mulf %106, %105 : vector<2x1024xf32>
    %cst_29 = arith.constant 1.00950558E-4 : f32
    %108 = vector.broadcast %cst_29 : f32 to vector<2x1024xf32>
    %109 = arith.addf %108, %107 : vector<2x1024xf32>
    %110 = arith.mulf %109, %105 : vector<2x1024xf32>
    %cst_30 = arith.constant 0.00134934322 : f32
    %111 = vector.broadcast %cst_30 : f32 to vector<2x1024xf32>
    %112 = arith.addf %111, %110 : vector<2x1024xf32>
    %113 = arith.mulf %112, %105 : vector<2x1024xf32>
    %cst_31 = arith.constant -0.00367342844 : f32
    %114 = vector.broadcast %cst_31 : f32 to vector<2x1024xf32>
    %115 = arith.addf %114, %113 : vector<2x1024xf32>
    %116 = arith.mulf %115, %105 : vector<2x1024xf32>
    %cst_32 = arith.constant 0.00573950773 : f32
    %117 = vector.broadcast %cst_32 : f32 to vector<2x1024xf32>
    %118 = arith.addf %117, %116 : vector<2x1024xf32>
    %119 = arith.mulf %118, %105 : vector<2x1024xf32>
    %cst_33 = arith.constant -0.0076224613 : f32
    %120 = vector.broadcast %cst_33 : f32 to vector<2x1024xf32>
    %121 = arith.addf %120, %119 : vector<2x1024xf32>
    %122 = arith.mulf %121, %105 : vector<2x1024xf32>
    %cst_34 = arith.constant 0.00943887047 : f32
    %123 = vector.broadcast %cst_34 : f32 to vector<2x1024xf32>
    %124 = arith.addf %123, %122 : vector<2x1024xf32>
    %125 = arith.mulf %124, %105 : vector<2x1024xf32>
    %cst_35 = arith.constant 1.00167406 : f32
    %126 = vector.broadcast %cst_35 : f32 to vector<2x1024xf32>
    %127 = arith.addf %126, %125 : vector<2x1024xf32>
    %128 = arith.mulf %127, %105 : vector<2x1024xf32>
    %cst_36 = arith.constant 2.83297682 : f32
    %129 = vector.broadcast %cst_36 : f32 to vector<2x1024xf32>
    %130 = arith.addf %129, %128 : vector<2x1024xf32>
    %cst_37 = arith.constant 5.000000e+00 : f32
    %131 = vector.broadcast %cst_37 : f32 to vector<2x1024xf32>
    %132 = arith.cmpf olt, %75, %131 : vector<2x1024xf32>
    %133 = arith.select %132, %102, %130 : vector<2x1024xi1>, vector<2x1024xf32>
    %134 = arith.mulf %133, %67 : vector<2x1024xf32>
    %cst_38 = arith.constant 1.41421354 : f32
    %135 = vector.broadcast %cst_38 : f32 to vector<2x1024xf32>
    %136 = arith.mulf %135, %134 : vector<2x1024xf32>
    %c8_i32_39 = arith.constant 8 : i32
    %137 = vector.broadcast %c8_i32_39 : i32 to vector<2x1024xi32>
    %138 = arith.shrui %55, %137 : vector<2x1024xi32>
    %139 = tpu.bitcast %138 : vector<2x1024xi32> -> vector<2x1024xi32>
    %140 = arith.sitofp %139 : vector<2x1024xi32> to vector<2x1024xf32>
    %cst_40 = arith.constant 5.000000e-01 : f32
    %141 = vector.broadcast %cst_40 : f32 to vector<2x1024xf32>
    %142 = arith.addf %140, %141 : vector<2x1024xf32>
    %cst_41 = arith.constant 5.96046448E-8 : f32
    %143 = vector.broadcast %cst_41 : f32 to vector<2x1024xf32>
    %144 = arith.mulf %142, %143 : vector<2x1024xf32>
    %cst_42 = arith.constant 2.000000e+00 : f32
    %145 = vector.broadcast %cst_42 : f32 to vector<2x1024xf32>
    %146 = arith.mulf %145, %144 : vector<2x1024xf32>
    %cst_43 = arith.constant 1.000000e+00 : f32
    %147 = vector.broadcast %cst_43 : f32 to vector<2x1024xf32>
    %148 = arith.subf %146, %147 : vector<2x1024xf32>
    %cst_44 = arith.constant 1.000000e+00 : f32
    %149 = vector.broadcast %cst_44 : f32 to vector<2x1024xf32>
    %150 = arith.subf %149, %148 : vector<2x1024xf32>
    %cst_45 = arith.constant 1.000000e+00 : f32
    %151 = vector.broadcast %cst_45 : f32 to vector<2x1024xf32>
    %152 = arith.addf %151, %148 : vector<2x1024xf32>
    %153 = arith.mulf %150, %152 : vector<2x1024xf32>
    %154 = math.log %153 : vector<2x1024xf32>
    %cst_46 = arith.constant 0.000000e+00 : f32
    %155 = vector.broadcast %cst_46 : f32 to vector<2x1024xf32>
    %156 = arith.subf %155, %154 : vector<2x1024xf32>
    %cst_47 = arith.constant 2.500000e+00 : f32
    %157 = vector.broadcast %cst_47 : f32 to vector<2x1024xf32>
    %158 = arith.subf %156, %157 : vector<2x1024xf32>
    %cst_48 = arith.constant 2.81022636E-8 : f32
    %159 = vector.broadcast %cst_48 : f32 to vector<2x1024xf32>
    %160 = arith.mulf %159, %158 : vector<2x1024xf32>
    %cst_49 = arith.constant 3.43273939E-7 : f32
    %161 = vector.broadcast %cst_49 : f32 to vector<2x1024xf32>
    %162 = arith.addf %161, %160 : vector<2x1024xf32>
    %163 = arith.mulf %162, %158 : vector<2x1024xf32>
    %cst_50 = arith.constant -3.5233877E-6 : f32
    %164 = vector.broadcast %cst_50 : f32 to vector<2x1024xf32>
    %165 = arith.addf %164, %163 : vector<2x1024xf32>
    %166 = arith.mulf %165, %158 : vector<2x1024xf32>
    %cst_51 = arith.constant -4.39150654E-6 : f32
    %167 = vector.broadcast %cst_51 : f32 to vector<2x1024xf32>
    %168 = arith.addf %167, %166 : vector<2x1024xf32>
    %169 = arith.mulf %168, %158 : vector<2x1024xf32>
    %cst_52 = arith.constant 2.1858087E-4 : f32
    %170 = vector.broadcast %cst_52 : f32 to vector<2x1024xf32>
    %171 = arith.addf %170, %169 : vector<2x1024xf32>
    %172 = arith.mulf %171, %158 : vector<2x1024xf32>
    %cst_53 = arith.constant -0.00125372503 : f32
    %173 = vector.broadcast %cst_53 : f32 to vector<2x1024xf32>
    %174 = arith.addf %173, %172 : vector<2x1024xf32>
    %175 = arith.mulf %174, %158 : vector<2x1024xf32>
    %cst_54 = arith.constant -0.00417768164 : f32
    %176 = vector.broadcast %cst_54 : f32 to vector<2x1024xf32>
    %177 = arith.addf %176, %175 : vector<2x1024xf32>
    %178 = arith.mulf %177, %158 : vector<2x1024xf32>
    %cst_55 = arith.constant 0.246640727 : f32
    %179 = vector.broadcast %cst_55 : f32 to vector<2x1024xf32>
    %180 = arith.addf %179, %178 : vector<2x1024xf32>
    %181 = arith.mulf %180, %158 : vector<2x1024xf32>
    %cst_56 = arith.constant 1.50140941 : f32
    %182 = vector.broadcast %cst_56 : f32 to vector<2x1024xf32>
    %183 = arith.addf %182, %181 : vector<2x1024xf32>
    %184 = math.sqrt %156 : vector<2x1024xf32>
    %cst_57 = arith.constant 3.000000e+00 : f32
    %185 = vector.broadcast %cst_57 : f32 to vector<2x1024xf32>
    %186 = arith.subf %184, %185 : vector<2x1024xf32>
    %cst_58 = arith.constant -2.00214257E-4 : f32
    %187 = vector.broadcast %cst_58 : f32 to vector<2x1024xf32>
    %188 = arith.mulf %187, %186 : vector<2x1024xf32>
    %cst_59 = arith.constant 1.00950558E-4 : f32
    %189 = vector.broadcast %cst_59 : f32 to vector<2x1024xf32>
    %190 = arith.addf %189, %188 : vector<2x1024xf32>
    %191 = arith.mulf %190, %186 : vector<2x1024xf32>
    %cst_60 = arith.constant 0.00134934322 : f32
    %192 = vector.broadcast %cst_60 : f32 to vector<2x1024xf32>
    %193 = arith.addf %192, %191 : vector<2x1024xf32>
    %194 = arith.mulf %193, %186 : vector<2x1024xf32>
    %cst_61 = arith.constant -0.00367342844 : f32
    %195 = vector.broadcast %cst_61 : f32 to vector<2x1024xf32>
    %196 = arith.addf %195, %194 : vector<2x1024xf32>
    %197 = arith.mulf %196, %186 : vector<2x1024xf32>
    %cst_62 = arith.constant 0.00573950773 : f32
    %198 = vector.broadcast %cst_62 : f32 to vector<2x1024xf32>
    %199 = arith.addf %198, %197 : vector<2x1024xf32>
    %200 = arith.mulf %199, %186 : vector<2x1024xf32>
    %cst_63 = arith.constant -0.0076224613 : f32
    %201 = vector.broadcast %cst_63 : f32 to vector<2x1024xf32>
    %202 = arith.addf %201, %200 : vector<2x1024xf32>
    %203 = arith.mulf %202, %186 : vector<2x1024xf32>
    %cst_64 = arith.constant 0.00943887047 : f32
    %204 = vector.broadcast %cst_64 : f32 to vector<2x1024xf32>
    %205 = arith.addf %204, %203 : vector<2x1024xf32>
    %206 = arith.mulf %205, %186 : vector<2x1024xf32>
    %cst_65 = arith.constant 1.00167406 : f32
    %207 = vector.broadcast %cst_65 : f32 to vector<2x1024xf32>
    %208 = arith.addf %207, %206 : vector<2x1024xf32>
    %209 = arith.mulf %208, %186 : vector<2x1024xf32>
    %cst_66 = arith.constant 2.83297682 : f32
    %210 = vector.broadcast %cst_66 : f32 to vector<2x1024xf32>
    %211 = arith.addf %210, %209 : vector<2x1024xf32>
    %cst_67 = arith.constant 5.000000e+00 : f32
    %212 = vector.broadcast %cst_67 : f32 to vector<2x1024xf32>
    %213 = arith.cmpf olt, %156, %212 : vector<2x1024xf32>
    %214 = arith.select %213, %183, %211 : vector<2x1024xi1>, vector<2x1024xf32>
    %215 = arith.mulf %214, %148 : vector<2x1024xf32>
    %cst_68 = arith.constant 1.41421354 : f32
    %216 = vector.broadcast %cst_68 : f32 to vector<2x1024xf32>
    %217 = arith.mulf %216, %215 : vector<2x1024xf32>
    %cst_69 = arith.constant 0.223606795 : f32
    %218 = vector.broadcast %cst_69 : f32 to vector<2x1024xf32>
    %219 = arith.mulf %218, %217 : vector<2x1024xf32>
    %c0_70 = arith.constant 0 : index
    %c0_71 = arith.constant 0 : index
    %220 = vector.load %arg2[%c0_70, %c0_71] : memref<2x1024xf32, #tpu.memory_space<vmem>>, vector<2x1024xf32>
    %221 = arith.mulf %136, %220 : vector<2x1024xf32>
    %222 = arith.addf %221, %219 : vector<2x1024xf32>
    %cst_72 = arith.constant 9.99999974E-6 : f32
    %223 = vector.broadcast %cst_72 : f32 to vector<2x1024xf32>
    %224 = arith.addf %136, %223 : vector<2x1024xf32>
    %225 = arith.divf %222, %224 : vector<2x1024xf32>
    %c0_73 = arith.constant 0 : index
    %c0_74 = arith.constant 0 : index
    %226 = vector.load %arg3[%c0_73, %c0_74] : memref<2x1024xf32, #tpu.memory_space<vmem>>, vector<2x1024xf32>
    tpu.vector_store %arg3[%c0_73, %c0_74], %225 {strides = array<i32>} : memref<2x1024xf32, #tpu.memory_space<vmem>>, vector<2x1024xf32>,
    return
  }
  func.func @transform_0(%arg0: i32, %arg1: memref<1xi32, #tpu.memory_space<smem>>) -> (i32, i32) {
    %c0_i32 = arith.constant 0 : i32
    %c0_i32_0 = arith.constant 0 : i32
    return %arg0, %c0_i32 : i32, i32
  }
  func.func @transform_1(%arg0: i32, %arg1: memref<1xi32, #tpu.memory_space<smem>>) -> (i32, i32) {
    %c0_i32 = arith.constant 0 : i32
    %c0_i32_0 = arith.constant 0 : i32
    return %arg0, %c0_i32 : i32, i32
  }
}

</mosaic_0001>

<llo_original>
// kernel: tpu_custom_call.1
$region0: #{tpu_custom_call.1}
  #allocation0 [shape = 'u32[]', space=smem, size = 0x4, offset = 0x4, fixed_abs, tag = 'smem constant byte address 0x4 - core index']
  #allocation1 [shape = 'u32[144,128]{1,0:T(1,128)}', space=vmem, size = 0x12000, scoped, tag = 'internal scratch']
  #allocation2 [shape = 's32[1]{0}', space=sflag, size = 0x4, scoped, tag = 'scoped memory for tpu_custom_call.1']
  #allocation3 [shape = 's32[1]{0:T(128)S(6)}', space=smem, size = 0x200, scoped, tag = 'prefetched SMEM operand 0']
  %s0 = inlined_call_operand.<no memory space> [shape: s32[1], index: 0, kind: input, shape index: {}]
  %s1 = inlined_call_operand.hbm [shape: f32[2,1024], index: 1, kind: input, shape index: {}]
  %s2 = inlined_call_operand.hbm [shape: f32[2,1024], index: 2, kind: output, shape index: {}]
  %s3 = sld [smem:[#allocation0]]
  $region18: #{tpu_custom_call.1} parent=0
    _
  %s5 = ssub.s32 1, %s3
  %s6 = scalar_select 0, %s5, %s3
  %7 = sst [smem:[#allocation3]] %s0
  $region1: #{tpu_custom_call.1} parent=0
    #allocation4 [shape = 'u8[8192]{0}', space=vmem, size = 0x2000, scoped, tag = 'input window, operand 1, single buffered']
    #allocation5 [shape = 's32[1]{0}', space=sflag, size = 0x4, scoped, tag = 'scoped memory for tpu_custom_call.1']
    #allocation6 [shape = 's32[1]{0}', space=sflag, size = 0x4, scoped, tag = 'scoped memory for tpu_custom_call.1']
    #allocation7 [shape = 'u8[8192]{0}', space=vmem, size = 0x2000, scoped, tag = 'output window, operand 0, single buffered']
    %8 = vsyncpa [#allocation5], 0
    %9 = vsyncpa [#allocation6], 0
    // Predicated region
    $region2: #{tpu_custom_call.1} parent=1 // pred_check
      _
    $region3: #{tpu_custom_call.1} parent=1 // pred_check_branch
      %11 = sbr.rel (0) target = $region5
    $region4: #{tpu_custom_call.1} parent=1 // pred_region
      %s13 = ssub.s32 256, 256
      %14 = vsyncadd [#allocation5], %s13
      %s16 = sshll.u32 [#allocation4], 4
      %s17 = int_to_ptr.vmem [resolvable:$true] %s16
      %19 = dma.hbm_to_vmem [thread:$0]  %s1, 256, %s17, [#allocation5]
    $region5: #{tpu_custom_call.1} parent=1 // pred_fallthru
      _
    // Predicated region
    $region6: #{tpu_custom_call.1} parent=1 // pred_check
      _
    $region7: #{tpu_custom_call.1} parent=1 // pred_check_branch
      %21 = sbr.rel (0) target = $region9
    $region8: #{tpu_custom_call.1} parent=1 // pred_region
      %22 = dma.done [#allocation5], 256
    $region9: #{tpu_custom_call.1} parent=1 // pred_fallthru
      _
    %s23 = smul.u32 0, 2
    %v24 = vlaneseq
    %v25 = vshrl.u32 %v24, 7
    %v26 = vlaneseq
    %v27 = vand.u32 %v26, 127
    %v28 = vadd.s32 %v27, 128
    %v29 = vadd.s32 %v27, 256
    %v30 = vadd.s32 %v27, 384
    %v31 = vadd.s32 %v27, 512
    %v32 = vadd.s32 %v27, 640
    %v33 = vadd.s32 %v27, 768
    %v34 = vadd.s32 %v27, 896
    %v35 = vstv %s23
    %v36 = vadd.s32 %v25, %v35
    %v37 = vmul.u32 %v36, 1024
    %v38 = vadd.s32 %v37, %v27
    %v39 = vadd.s32 %v37, %v28
    %v40 = vadd.s32 %v37, %v29
    %v41 = vadd.s32 %v37, %v30
    %v42 = vadd.s32 %v37, %v31
    %v43 = vadd.s32 %v37, %v32
    %v44 = vadd.s32 %v37, %v33
    %v45 = vadd.s32 %v37, %v34
    %s46 = sld [smem:[#allocation3]]
    %s47 = smul.u32 %s46, 1640531527
    %v48 = vstv %s47
    %v49 = vadd.s32 %v38, %v48
    %v50 = vadd.s32 %v39, %v48
    %v51 = vadd.s32 %v40, %v48
    %v52 = vadd.s32 %v41, %v48
    %v53 = vadd.s32 %v42, %v48
    %v54 = vadd.s32 %v43, %v48
    %v55 = vadd.s32 %v44, %v48
    %v56 = vadd.s32 %v45, %v48
    %v57 = vshrl.u32 %v49, 16
    %v58 = vshrl.u32 %v50, 16
    %v59 = vshrl.u32 %v51, 16
    %v60 = vshrl.u32 %v52, 16
    %v61 = vshrl.u32 %v53, 16
    %v62 = vshrl.u32 %v54, 16
    %v63 = vshrl.u32 %v55, 16
    %v64 = vshrl.u32 %v56, 16
    %v65 = vxor.u32 %v49, %v57
    %v66 = vxor.u32 %v50, %v58
    %v67 = vxor.u32 %v51, %v59
    %v68 = vxor.u32 %v52, %v60
    %v69 = vxor.u32 %v53, %v61
    %v70 = vxor.u32 %v54, %v62
    %v71 = vxor.u32 %v55, %v63
    %v72 = vxor.u32 %v56, %v64
    %v73 = vmul.u32 %v65, 2146121005
    %v74 = vmul.u32 %v66, 2146121005
    %v75 = vmul.u32 %v67, 2146121005
    %v76 = vmul.u32 %v68, 2146121005
    %v77 = vmul.u32 %v69, 2146121005
    %v78 = vmul.u32 %v70, 2146121005
    %v79 = vmul.u32 %v71, 2146121005
    %v80 = vmul.u32 %v72, 2146121005
    %v81 = vshrl.u32 %v73, 15
    %v82 = vshrl.u32 %v74, 15
    %v83 = vshrl.u32 %v75, 15
    %v84 = vshrl.u32 %v76, 15
    %v85 = vshrl.u32 %v77, 15
    %v86 = vshrl.u32 %v78, 15
    %v87 = vshrl.u32 %v79, 15
    %v88 = vshrl.u32 %v80, 15
    %v89 = vxor.u32 %v73, %v81
    %v90 = vxor.u32 %v74, %v82
    %v91 = vxor.u32 %v75, %v83
    %v92 = vxor.u32 %v76, %v84
    %v93 = vxor.u32 %v77, %v85
    %v94 = vxor.u32 %v78, %v86
    %v95 = vxor.u32 %v79, %v87
    %v96 = vxor.u32 %v80, %v88
    %v97 = vmul.u32 %v89, 2221713035
    %v98 = vmul.u32 %v90, 2221713035
    %v99 = vmul.u32 %v91, 2221713035
    %v100 = vmul.u32 %v92, 2221713035
    %v101 = vmul.u32 %v93, 2221713035
    %v102 = vmul.u32 %v94, 2221713035
    %v103 = vmul.u32 %v95, 2221713035
    %v104 = vmul.u32 %v96, 2221713035
    %v105 = vshrl.u32 %v97, 16
    %v106 = vshrl.u32 %v98, 16
    %v107 = vshrl.u32 %v99, 16
    %v108 = vshrl.u32 %v100, 16
    %v109 = vshrl.u32 %v101, 16
    %v110 = vshrl.u32 %v102, 16
    %v111 = vshrl.u32 %v103, 16
    %v112 = vshrl.u32 %v104, 16
    %v113 = vxor.u32 %v97, %v105
    %v114 = vxor.u32 %v98, %v106
    %v115 = vxor.u32 %v99, %v107
    %v116 = vxor.u32 %v100, %v108
    %v117 = vxor.u32 %v101, %v109
    %v118 = vxor.u32 %v102, %v110
    %v119 = vxor.u32 %v103, %v111
    %v120 = vxor.u32 %v104, %v112
    %v121 = vxor.u32 %v113, 2769414579
    %v122 = vxor.u32 %v114, 2769414579
    %v123 = vxor.u32 %v115, 2769414579
    %v124 = vxor.u32 %v116, 2769414579
    %v125 = vxor.u32 %v117, 2769414579
    %v126 = vxor.u32 %v118, 2769414579
    %v127 = vxor.u32 %v119, 2769414579
    %v128 = vxor.u32 %v120, 2769414579
    %v129 = vshrl.u32 %v121, 16
    %v130 = vshrl.u32 %v122, 16
    %v131 = vshrl.u32 %v123, 16
    %v132 = vshrl.u32 %v124, 16
    %v133 = vshrl.u32 %v125, 16
    %v134 = vshrl.u32 %v126, 16
    %v135 = vshrl.u32 %v127, 16
    %v136 = vshrl.u32 %v128, 16
    %v137 = vxor.u32 %v121, %v129
    %v138 = vxor.u32 %v122, %v130
    %v139 = vxor.u32 %v123, %v131
    %v140 = vxor.u32 %v124, %v132
    %v141 = vxor.u32 %v125, %v133
    %v142 = vxor.u32 %v126, %v134
    %v143 = vxor.u32 %v127, %v135
    %v144 = vxor.u32 %v128, %v136
    %v145 = vmul.u32 %v137, 2146121005
    %v146 = vmul.u32 %v138, 2146121005
    %v147 = vmul.u32 %v139, 2146121005
    %v148 = vmul.u32 %v140, 2146121005
    %v149 = vmul.u32 %v141, 2146121005
    %v150 = vmul.u32 %v142, 2146121005
    %v151 = vmul.u32 %v143, 2146121005
    %v152 = vmul.u32 %v144, 2146121005
    %v153 = vshrl.u32 %v145, 15
    %v154 = vshrl.u32 %v146, 15
    %v155 = vshrl.u32 %v147, 15
    %v156 = vshrl.u32 %v148, 15
    %v157 = vshrl.u32 %v149, 15
    %v158 = vshrl.u32 %v150, 15
    %v159 = vshrl.u32 %v151, 15
    %v160 = vshrl.u32 %v152, 15
    %v161 = vxor.u32 %v145, %v153
    %v162 = vxor.u32 %v146, %v154
    %v163 = vxor.u32 %v147, %v155
    %v164 = vxor.u32 %v148, %v156
    %v165 = vxor.u32 %v149, %v157
    %v166 = vxor.u32 %v150, %v158
    %v167 = vxor.u32 %v151, %v159
    %v168 = vxor.u32 %v152, %v160
    %v169 = vmul.u32 %v161, 2221713035
    %v170 = vmul.u32 %v162, 2221713035
    %v171 = vmul.u32 %v163, 2221713035
    %v172 = vmul.u32 %v164, 2221713035
    %v173 = vmul.u32 %v165, 2221713035
    %v174 = vmul.u32 %v166, 2221713035
    %v175 = vmul.u32 %v167, 2221713035
    %v176 = vmul.u32 %v168, 2221713035
    %v177 = vshrl.u32 %v169, 16
    %v178 = vshrl.u32 %v170, 16
    %v179 = vshrl.u32 %v171, 16
    %v180 = vshrl.u32 %v172, 16
    %v181 = vshrl.u32 %v173, 16
    %v182 = vshrl.u32 %v174, 16
    %v183 = vshrl.u32 %v175, 16
    %v184 = vshrl.u32 %v176, 16
    %v185 = vxor.u32 %v169, %v177
    %v186 = vxor.u32 %v170, %v178
    %v187 = vxor.u32 %v171, %v179
    %v188 = vxor.u32 %v172, %v180
    %v189 = vxor.u32 %v173, %v181
    %v190 = vxor.u32 %v174, %v182
    %v191 = vxor.u32 %v175, %v183
    %v192 = vxor.u32 %v176, %v184
    %v193 = vxor.u32 %v113, 1675113877
    %v194 = vxor.u32 %v114, 1675113877
    %v195 = vxor.u32 %v115, 1675113877
    %v196 = vxor.u32 %v116, 1675113877
    %v197 = vxor.u32 %v117, 1675113877
    %v198 = vxor.u32 %v118, 1675113877
    %v199 = vxor.u32 %v119, 1675113877
    %v200 = vxor.u32 %v120, 1675113877
    %v201 = vshrl.u32 %v193, 16
    %v202 = vshrl.u32 %v194, 16
    %v203 = vshrl.u32 %v195, 16
    %v204 = vshrl.u32 %v196, 16
    %v205 = vshrl.u32 %v197, 16
    %v206 = vshrl.u32 %v198, 16
    %v207 = vshrl.u32 %v199, 16
    %v208 = vshrl.u32 %v200, 16
    %v209 = vxor.u32 %v193, %v201
    %v210 = vxor.u32 %v194, %v202
    %v211 = vxor.u32 %v195, %v203
    %v212 = vxor.u32 %v196, %v204
    %v213 = vxor.u32 %v197, %v205
    %v214 = vxor.u32 %v198, %v206
    %v215 = vxor.u32 %v199, %v207
    %v216 = vxor.u32 %v200, %v208
    %v217 = vmul.u32 %v209, 2146121005
    %v218 = vmul.u32 %v210, 2146121005
    %v219 = vmul.u32 %v211, 2146121005
    %v220 = vmul.u32 %v212, 2146121005
    %v221 = vmul.u32 %v213, 2146121005
    %v222 = vmul.u32 %v214, 2146121005
    %v223 = vmul.u32 %v215, 2146121005
    %v224 = vmul.u32 %v216, 2146121005
    %v225 = vshrl.u32 %v217, 15
    %v226 = vshrl.u32 %v218, 15
    %v227 = vshrl.u32 %v219, 15
    %v228 = vshrl.u32 %v220, 15
    %v229 = vshrl.u32 %v221, 15
    %v230 = vshrl.u32 %v222, 15
    %v231 = vshrl.u32 %v223, 15
    %v232 = vshrl.u32 %v224, 15
    %v233 = vxor.u32 %v217, %v225
    %v234 = vxor.u32 %v218, %v226
    %v235 = vxor.u32 %v219, %v227
    %v236 = vxor.u32 %v220, %v228
    %v237 = vxor.u32 %v221, %v229
    %v238 = vxor.u32 %v222, %v230
    %v239 = vxor.u32 %v223, %v231
    %v240 = vxor.u32 %v224, %v232
    %v241 = vmul.u32 %v233, 2221713035
    %v242 = vmul.u32 %v234, 2221713035
    %v243 = vmul.u32 %v235, 2221713035
    %v244 = vmul.u32 %v236, 2221713035
    %v245 = vmul.u32 %v237, 2221713035
    %v246 = vmul.u32 %v238, 2221713035
    %v247 = vmul.u32 %v239, 2221713035
    %v248 = vmul.u32 %v240, 2221713035
    %v249 = vshrl.u32 %v241, 16
    %v250 = vshrl.u32 %v242, 16
    %v251 = vshrl.u32 %v243, 16
    %v252 = vshrl.u32 %v244, 16
    %v253 = vshrl.u32 %v245, 16
    %v254 = vshrl.u32 %v246, 16
    %v255 = vshrl.u32 %v247, 16
    %v256 = vshrl.u32 %v248, 16
    %v257 = vxor.u32 %v241, %v249
    %v258 = vxor.u32 %v242, %v250
    %v259 = vxor.u32 %v243, %v251
    %v260 = vxor.u32 %v244, %v252
    %v261 = vxor.u32 %v245, %v253
    %v262 = vxor.u32 %v246, %v254
    %v263 = vxor.u32 %v247, %v255
    %v264 = vxor.u32 %v248, %v256
    %v265 = vshrl.u32 %v185, 8
    %v266 = vshrl.u32 %v186, 8
    %v267 = vshrl.u32 %v187, 8
    %v268 = vshrl.u32 %v188, 8
    %v269 = vshrl.u32 %v189, 8
    %v270 = vshrl.u32 %v190, 8
    %v271 = vshrl.u32 %v191, 8
    %v272 = vshrl.u32 %v192, 8
    %v273 = vcvt.s32.f32 %v265
    %v274 = vcvt.s32.f32 %v266
    %v275 = vcvt.s32.f32 %v267
    %v276 = vcvt.s32.f32 %v268
    %v277 = vcvt.s32.f32 %v269
    %v278 = vcvt.s32.f32 %v270
    %v279 = vcvt.s32.f32 %v271
    %v280 = vcvt.s32.f32 %v272
    %v281 = vadd.f32 %v273, 0.5
    %v282 = vadd.f32 %v274, 0.5
    %v283 = vadd.f32 %v275, 0.5
    %v284 = vadd.f32 %v276, 0.5
    %v285 = vadd.f32 %v277, 0.5
    %v286 = vadd.f32 %v278, 0.5
    %v287 = vadd.f32 %v279, 0.5
    %v288 = vadd.f32 %v280, 0.5
    %v289 = vmul.f32 %v281, 5.9604645e-08
    %v290 = vmul.f32 %v282, 5.9604645e-08
    %v291 = vmul.f32 %v283, 5.9604645e-08
    %v292 = vmul.f32 %v284, 5.9604645e-08
    %v293 = vmul.f32 %v285, 5.9604645e-08
    %v294 = vmul.f32 %v286, 5.9604645e-08
    %v295 = vmul.f32 %v287, 5.9604645e-08
    %v296 = vmul.f32 %v288, 5.9604645e-08
    %v297 = vmul.f32 %v289, 2.0
    %v298 = vmul.f32 %v290, 2.0
    %v299 = vmul.f32 %v291, 2.0
    %v300 = vmul.f32 %v292, 2.0
    %v301 = vmul.f32 %v293, 2.0
    %v302 = vmul.f32 %v294, 2.0
    %v303 = vmul.f32 %v295, 2.0
    %v304 = vmul.f32 %v296, 2.0
    %v305 = vsub.f32 %v297, 1.0
    %v306 = vsub.f32 %v298, 1.0
    %v307 = vsub.f32 %v299, 1.0
    %v308 = vsub.f32 %v300, 1.0
    %v309 = vsub.f32 %v301, 1.0
    %v310 = vsub.f32 %v302, 1.0
    %v311 = vsub.f32 %v303, 1.0
    %v312 = vsub.f32 %v304, 1.0
    %v313 = vsub.f32 1.0, %v305
    %v314 = vsub.f32 1.0, %v306
    %v315 = vsub.f32 1.0, %v307
    %v316 = vsub.f32 1.0, %v308
    %v317 = vsub.f32 1.0, %v309
    %v318 = vsub.f32 1.0, %v310
    %v319 = vsub.f32 1.0, %v311
    %v320 = vsub.f32 1.0, %v312
    %v321 = vadd.f32 %v305, 1.0
    %v322 = vadd.f32 %v306, 1.0
    %v323 = vadd.f32 %v307, 1.0
    %v324 = vadd.f32 %v308, 1.0
    %v325 = vadd.f32 %v309, 1.0
    %v326 = vadd.f32 %v310, 1.0
    %v327 = vadd.f32 %v311, 1.0
    %v328 = vadd.f32 %v312, 1.0
    %v329 = vmul.f32 %v313, %v321
    %v330 = vmul.f32 %v314, %v322
    %v331 = vmul.f32 %v315, %v323
    %v332 = vmul.f32 %v316, %v324
    %v333 = vmul.f32 %v317, %v325
    %v334 = vmul.f32 %v318, %v326
    %v335 = vmul.f32 %v319, %v327
    %v336 = vmul.f32 %v320, %v328
    %v337 = vlog2.pop %v329
    %v338 = vmul.f32 %v337, 0.6931472
    %v339 = vlog2.pop %v330
    %v340 = vmul.f32 %v339, 0.6931472
    %v341 = vlog2.pop %v331
    %v342 = vmul.f32 %v341, 0.6931472
    %v343 = vlog2.pop %v332
    %v344 = vmul.f32 %v343, 0.6931472
    %v345 = vlog2.pop %v333
    %v346 = vmul.f32 %v345, 0.6931472
    %v347 = vlog2.pop %v334
    %v348 = vmul.f32 %v347, 0.6931472
    %v349 = vlog2.pop %v335
    %v350 = vmul.f32 %v349, 0.6931472
    %v351 = vlog2.pop %v336
    %v352 = vmul.f32 %v351, 0.6931472
    %v353 = vsub.f32 0.0, %v338
    %v354 = vsub.f32 0.0, %v340
    %v355 = vsub.f32 0.0, %v342
    %v356 = vsub.f32 0.0, %v344
    %v357 = vsub.f32 0.0, %v346
    %v358 = vsub.f32 0.0, %v348
    %v359 = vsub.f32 0.0, %v350
    %v360 = vsub.f32 0.0, %v352
    %v361 = vsub.f32 %v353, 2.5
    %v362 = vsub.f32 %v354, 2.5
    %v363 = vsub.f32 %v355, 2.5
    %v364 = vsub.f32 %v356, 2.5
    %v365 = vsub.f32 %v357, 2.5
    %v366 = vsub.f32 %v358, 2.5
    %v367 = vsub.f32 %v359, 2.5
    %v368 = vsub.f32 %v360, 2.5
    %v369 = vmul.f32 %v361, 2.8102264e-08
    %v370 = vmul.f32 %v362, 2.8102264e-08
    %v371 = vmul.f32 %v363, 2.8102264e-08
    %v372 = vmul.f32 %v364, 2.8102264e-08
    %v373 = vmul.f32 %v365, 2.8102264e-08
    %v374 = vmul.f32 %v366, 2.8102264e-08
    %v375 = vmul.f32 %v367, 2.8102264e-08
    %v376 = vmul.f32 %v368, 2.8102264e-08
    %v377 = vadd.f32 %v369, 3.4327394e-07
    %v378 = vadd.f32 %v370, 3.4327394e-07
    %v379 = vadd.f32 %v371, 3.4327394e-07
    %v380 = vadd.f32 %v372, 3.4327394e-07
    %v381 = vadd.f32 %v373, 3.4327394e-07
    %v382 = vadd.f32 %v374, 3.4327394e-07
    %v383 = vadd.f32 %v375, 3.4327394e-07
    %v384 = vadd.f32 %v376, 3.4327394e-07
    %v385 = vmul.f32 %v377, %v361
    %v386 = vmul.f32 %v378, %v362
    %v387 = vmul.f32 %v379, %v363
    %v388 = vmul.f32 %v380, %v364
    %v389 = vmul.f32 %v381, %v365
    %v390 = vmul.f32 %v382, %v366
    %v391 = vmul.f32 %v383, %v367
    %v392 = vmul.f32 %v384, %v368
    %v393 = vadd.f32 %v385, -3.5233877e-06
    %v394 = vadd.f32 %v386, -3.5233877e-06
    %v395 = vadd.f32 %v387, -3.5233877e-06
    %v396 = vadd.f32 %v388, -3.5233877e-06
    %v397 = vadd.f32 %v389, -3.5233877e-06
    %v398 = vadd.f32 %v390, -3.5233877e-06
    %v399 = vadd.f32 %v391, -3.5233877e-06
    %v400 = vadd.f32 %v392, -3.5233877e-06
    %v401 = vmul.f32 %v393, %v361
    %v402 = vmul.f32 %v394, %v362
    %v403 = vmul.f32 %v395, %v363
    %v404 = vmul.f32 %v396, %v364
    %v405 = vmul.f32 %v397, %v365
    %v406 = vmul.f32 %v398, %v366
    %v407 = vmul.f32 %v399, %v367
    %v408 = vmul.f32 %v400, %v368
    %v409 = vadd.f32 %v401, -4.3915065e-06
    %v410 = vadd.f32 %v402, -4.3915065e-06
    %v411 = vadd.f32 %v403, -4.3915065e-06
    %v412 = vadd.f32 %v404, -4.3915065e-06
    %v413 = vadd.f32 %v405, -4.3915065e-06
    %v414 = vadd.f32 %v406, -4.3915065e-06
    %v415 = vadd.f32 %v407, -4.3915065e-06
    %v416 = vadd.f32 %v408, -4.3915065e-06
    %v417 = vmul.f32 %v409, %v361
    %v418 = vmul.f32 %v410, %v362
    %v419 = vmul.f32 %v411, %v363
    %v420 = vmul.f32 %v412, %v364
    %v421 = vmul.f32 %v413, %v365
    %v422 = vmul.f32 %v414, %v366
    %v423 = vmul.f32 %v415, %v367
    %v424 = vmul.f32 %v416, %v368
    %v425 = vadd.f32 %v417, 0.00021858087
    %v426 = vadd.f32 %v418, 0.00021858087
    %v427 = vadd.f32 %v419, 0.00021858087
    %v428 = vadd.f32 %v420, 0.00021858087
    %v429 = vadd.f32 %v421, 0.00021858087
    %v430 = vadd.f32 %v422, 0.00021858087
    %v431 = vadd.f32 %v423, 0.00021858087
    %v432 = vadd.f32 %v424, 0.00021858087
    %v433 = vmul.f32 %v425, %v361
    %v434 = vmul.f32 %v426, %v362
    %v435 = vmul.f32 %v427, %v363
    %v436 = vmul.f32 %v428, %v364
    %v437 = vmul.f32 %v429, %v365
    %v438 = vmul.f32 %v430, %v366
    %v439 = vmul.f32 %v431, %v367
    %v440 = vmul.f32 %v432, %v368
    %v441 = vadd.f32 %v433, -0.001253725
    %v442 = vadd.f32 %v434, -0.001253725
    %v443 = vadd.f32 %v435, -0.001253725
    %v444 = vadd.f32 %v436, -0.001253725
    %v445 = vadd.f32 %v437, -0.001253725
    %v446 = vadd.f32 %v438, -0.001253725
    %v447 = vadd.f32 %v439, -0.001253725
    %v448 = vadd.f32 %v440, -0.001253725
    %v449 = vmul.f32 %v441, %v361
    %v450 = vmul.f32 %v442, %v362
    %v451 = vmul.f32 %v443, %v363
    %v452 = vmul.f32 %v444, %v364
    %v453 = vmul.f32 %v445, %v365
    %v454 = vmul.f32 %v446, %v366
    %v455 = vmul.f32 %v447, %v367
    %v456 = vmul.f32 %v448, %v368
    %v457 = vadd.f32 %v449, -0.0041776816
    %v458 = vadd.f32 %v450, -0.0041776816
    %v459 = vadd.f32 %v451, -0.0041776816
    %v460 = vadd.f32 %v452, -0.0041776816
    %v461 = vadd.f32 %v453, -0.0041776816
    %v462 = vadd.f32 %v454, -0.0041776816
    %v463 = vadd.f32 %v455, -0.0041776816
    %v464 = vadd.f32 %v456, -0.0041776816
    %v465 = vmul.f32 %v457, %v361
    %v466 = vmul.f32 %v458, %v362
    %v467 = vmul.f32 %v459, %v363
    %v468 = vmul.f32 %v460, %v364
    %v469 = vmul.f32 %v461, %v365
    %v470 = vmul.f32 %v462, %v366
    %v471 = vmul.f32 %v463, %v367
    %v472 = vmul.f32 %v464, %v368
    %v473 = vadd.f32 %v465, 0.24664073
    %v474 = vadd.f32 %v466, 0.24664073
    %v475 = vadd.f32 %v467, 0.24664073
    %v476 = vadd.f32 %v468, 0.24664073
    %v477 = vadd.f32 %v469, 0.24664073
    %v478 = vadd.f32 %v470, 0.24664073
    %v479 = vadd.f32 %v471, 0.24664073
    %v480 = vadd.f32 %v472, 0.24664073
    %v481 = vmul.f32 %v473, %v361
    %v482 = vmul.f32 %v474, %v362
    %v483 = vmul.f32 %v475, %v363
    %v484 = vmul.f32 %v476, %v364
    %v485 = vmul.f32 %v477, %v365
    %v486 = vmul.f32 %v478, %v366
    %v487 = vmul.f32 %v479, %v367
    %v488 = vmul.f32 %v480, %v368
    %v489 = vadd.f32 %v481, 1.5014094
    %v490 = vadd.f32 %v482, 1.5014094
    %v491 = vadd.f32 %v483, 1.5014094
    %v492 = vadd.f32 %v484, 1.5014094
    %v493 = vadd.f32 %v485, 1.5014094
    %v494 = vadd.f32 %v486, 1.5014094
    %v495 = vadd.f32 %v487, 1.5014094
    %v496 = vadd.f32 %v488, 1.5014094
    %v497 = vrsqrt.pop %v353
    %v498 = vmul.f32 %v353, %v497
    %vm499 = vcmp.eq.f32.partialorder %v353, inf
    %v500 = vsel %vm499, %v353, %v498
    %vm501 = vcmp.eq.f32.partialorder %v353, 0.0
    %v502 = vand.u32 %v353, 2147483648
    %v503 = vsel %vm501, %v502, %v500
    %v504 = vrsqrt.pop %v354
    %v505 = vmul.f32 %v354, %v504
    %vm506 = vcmp.eq.f32.partialorder %v354, inf
    %v507 = vsel %vm506, %v354, %v505
    %vm508 = vcmp.eq.f32.partialorder %v354, 0.0
    %v509 = vand.u32 %v354, 2147483648
    %v510 = vsel %vm508, %v509, %v507
    %v511 = vrsqrt.pop %v355
    %v512 = vmul.f32 %v355, %v511
    %vm513 = vcmp.eq.f32.partialorder %v355, inf
    %v514 = vsel %vm513, %v355, %v512
    %vm515 = vcmp.eq.f32.partialorder %v355, 0.0
    %v516 = vand.u32 %v355, 2147483648
    %v517 = vsel %vm515, %v516, %v514
    %v518 = vrsqrt.pop %v356
    %v519 = vmul.f32 %v356, %v518
    %vm520 = vcmp.eq.f32.partialorder %v356, inf
    %v521 = vsel %vm520, %v356, %v519
    %vm522 = vcmp.eq.f32.partialorder %v356, 0.0
    %v523 = vand.u32 %v356, 2147483648
    %v524 = vsel %vm522, %v523, %v521
    %v525 = vrsqrt.pop %v357
    %v526 = vmul.f32 %v357, %v525
    %vm527 = vcmp.eq.f32.partialorder %v357, inf
    %v528 = vsel %vm527, %v357, %v526
    %vm529 = vcmp.eq.f32.partialorder %v357, 0.0
    %v530 = vand.u32 %v357, 2147483648
    %v531 = vsel %vm529, %v530, %v528
    %v532 = vrsqrt.pop %v358
    %v533 = vmul.f32 %v358, %v532
    %vm534 = vcmp.eq.f32.partialorder %v358, inf
    %v535 = vsel %vm534, %v358, %v533
    %vm536 = vcmp.eq.f32.partialorder %v358, 0.0
    %v537 = vand.u32 %v358, 2147483648
    %v538 = vsel %vm536, %v537, %v535
    %v539 = vrsqrt.pop %v359
    %v540 = vmul.f32 %v359, %v539
    %vm541 = vcmp.eq.f32.partialorder %v359, inf
    %v542 = vsel %vm541, %v359, %v540
    %vm543 = vcmp.eq.f32.partialorder %v359, 0.0
    %v544 = vand.u32 %v359, 2147483648
    %v545 = vsel %vm543, %v544, %v542
    %v546 = vrsqrt.pop %v360
    %v547 = vmul.f32 %v360, %v546
    %vm548 = vcmp.eq.f32.partialorder %v360, inf
    %v549 = vsel %vm548, %v360, %v547
    %vm550 = vcmp.eq.f32.partialorder %v360, 0.0
    %v551 = vand.u32 %v360, 2147483648
    %v552 = vsel %vm550, %v551, %v549
    %v553 = vsub.f32 %v503, 3.0
    %v554 = vsub.f32 %v510, 3.0
    %v555 = vsub.f32 %v517, 3.0
    %v556 = vsub.f32 %v524, 3.0
    %v557 = vsub.f32 %v531, 3.0
    %v558 = vsub.f32 %v538, 3.0
    %v559 = vsub.f32 %v545, 3.0
    %v560 = vsub.f32 %v552, 3.0
    %v561 = vmul.f32 %v553, -0.00020021426
    %v562 = vmul.f32 %v554, -0.00020021426
    %v563 = vmul.f32 %v555, -0.00020021426
    %v564 = vmul.f32 %v556, -0.00020021426
    %v565 = vmul.f32 %v557, -0.00020021426
    %v566 = vmul.f32 %v558, -0.00020021426
    %v567 = vmul.f32 %v559, -0.00020021426
    %v568 = vmul.f32 %v560, -0.00020021426
    %v569 = vadd.f32 %v561, 0.00010095056
    %v570 = vadd.f32 %v562, 0.00010095056
    %v571 = vadd.f32 %v563, 0.00010095056
    %v572 = vadd.f32 %v564, 0.00010095056
    %v573 = vadd.f32 %v565, 0.00010095056
    %v574 = vadd.f32 %v566, 0.00010095056
    %v575 = vadd.f32 %v567, 0.00010095056
    %v576 = vadd.f32 %v568, 0.00010095056
    %v577 = vmul.f32 %v569, %v553
    %v578 = vmul.f32 %v570, %v554
    %v579 = vmul.f32 %v571, %v555
    %v580 = vmul.f32 %v572, %v556
    %v581 = vmul.f32 %v573, %v557
    %v582 = vmul.f32 %v574, %v558
    %v583 = vmul.f32 %v575, %v559
    %v584 = vmul.f32 %v576, %v560
    %v585 = vadd.f32 %v577, 0.0013493432
    %v586 = vadd.f32 %v578, 0.0013493432
    %v587 = vadd.f32 %v579, 0.0013493432
    %v588 = vadd.f32 %v580, 0.0013493432
    %v589 = vadd.f32 %v581, 0.0013493432
    %v590 = vadd.f32 %v582, 0.0013493432
    %v591 = vadd.f32 %v583, 0.0013493432
    %v592 = vadd.f32 %v584, 0.0013493432
    %v593 = vmul.f32 %v585, %v553
    %v594 = vmul.f32 %v586, %v554
    %v595 = vmul.f32 %v587, %v555
    %v596 = vmul.f32 %v588, %v556
    %v597 = vmul.f32 %v589, %v557
    %v598 = vmul.f32 %v590, %v558
    %v599 = vmul.f32 %v591, %v559
    %v600 = vmul.f32 %v592, %v560
    %v601 = vadd.f32 %v593, -0.0036734284
    %v602 = vadd.f32 %v594, -0.0036734284
    %v603 = vadd.f32 %v595, -0.0036734284
    %v604 = vadd.f32 %v596, -0.0036734284
    %v605 = vadd.f32 %v597, -0.0036734284
    %v606 = vadd.f32 %v598, -0.0036734284
    %v607 = vadd.f32 %v599, -0.0036734284
    %v608 = vadd.f32 %v600, -0.0036734284
    %v609 = vmul.f32 %v601, %v553
    %v610 = vmul.f32 %v602, %v554
    %v611 = vmul.f32 %v603, %v555
    %v612 = vmul.f32 %v604, %v556
    %v613 = vmul.f32 %v605, %v557
    %v614 = vmul.f32 %v606, %v558
    %v615 = vmul.f32 %v607, %v559
    %v616 = vmul.f32 %v608, %v560
    %v617 = vadd.f32 %v609, 0.0057395077
    %v618 = vadd.f32 %v610, 0.0057395077
    %v619 = vadd.f32 %v611, 0.0057395077
    %v620 = vadd.f32 %v612, 0.0057395077
    %v621 = vadd.f32 %v613, 0.0057395077
    %v622 = vadd.f32 %v614, 0.0057395077
    %v623 = vadd.f32 %v615, 0.0057395077
    %v624 = vadd.f32 %v616, 0.0057395077
    %v625 = vmul.f32 %v617, %v553
    %v626 = vmul.f32 %v618, %v554
    %v627 = vmul.f32 %v619, %v555
    %v628 = vmul.f32 %v620, %v556
    %v629 = vmul.f32 %v621, %v557
    %v630 = vmul.f32 %v622, %v558
    %v631 = vmul.f32 %v623, %v559
    %v632 = vmul.f32 %v624, %v560
    %v633 = vadd.f32 %v625, -0.0076224613
    %v634 = vadd.f32 %v626, -0.0076224613
    %v635 = vadd.f32 %v627, -0.0076224613
    %v636 = vadd.f32 %v628, -0.0076224613
    %v637 = vadd.f32 %v629, -0.0076224613
    %v638 = vadd.f32 %v630, -0.0076224613
    %v639 = vadd.f32 %v631, -0.0076224613
    %v640 = vadd.f32 %v632, -0.0076224613
    %v641 = vmul.f32 %v633, %v553
    %v642 = vmul.f32 %v634, %v554
    %v643 = vmul.f32 %v635, %v555
    %v644 = vmul.f32 %v636, %v556
    %v645 = vmul.f32 %v637, %v557
    %v646 = vmul.f32 %v638, %v558
    %v647 = vmul.f32 %v639, %v559
    %v648 = vmul.f32 %v640, %v560
    %v649 = vadd.f32 %v641, 0.0094388705
    %v650 = vadd.f32 %v642, 0.0094388705
    %v651 = vadd.f32 %v643, 0.0094388705
    %v652 = vadd.f32 %v644, 0.0094388705
    %v653 = vadd.f32 %v645, 0.0094388705
    %v654 = vadd.f32 %v646, 0.0094388705
    %v655 = vadd.f32 %v647, 0.0094388705
    %v656 = vadd.f32 %v648, 0.0094388705
    %v657 = vmul.f32 %v649, %v553
    %v658 = vmul.f32 %v650, %v554
    %v659 = vmul.f32 %v651, %v555
    %v660 = vmul.f32 %v652, %v556
    %v661 = vmul.f32 %v653, %v557
    %v662 = vmul.f32 %v654, %v558
    %v663 = vmul.f32 %v655, %v559
    %v664 = vmul.f32 %v656, %v560
    %v665 = vadd.f32 %v657, 1.001674
    %v666 = vadd.f32 %v658, 1.001674
    %v667 = vadd.f32 %v659, 1.001674
    %v668 = vadd.f32 %v660, 1.001674
    %v669 = vadd.f32 %v661, 1.001674
    %v670 = vadd.f32 %v662, 1.001674
    %v671 = vadd.f32 %v663, 1.001674
    %v672 = vadd.f32 %v664, 1.001674
    %v673 = vmul.f32 %v665, %v553
    %v674 = vmul.f32 %v666, %v554
    %v675 = vmul.f32 %v667, %v555
    %v676 = vmul.f32 %v668, %v556
    %v677 = vmul.f32 %v669, %v557
    %v678 = vmul.f32 %v670, %v558
    %v679 = vmul.f32 %v671, %v559
    %v680 = vmul.f32 %v672, %v560
    %v681 = vadd.f32 %v673, 2.8329768
    %v682 = vadd.f32 %v674, 2.8329768
    %v683 = vadd.f32 %v675, 2.8329768
    %v684 = vadd.f32 %v676, 2.8329768
    %v685 = vadd.f32 %v677, 2.8329768
    %v686 = vadd.f32 %v678, 2.8329768
    %v687 = vadd.f32 %v679, 2.8329768
    %v688 = vadd.f32 %v680, 2.8329768
    %vm689 = vcmp.lt.f32.partialorder %v353, 5.0
    %vm690 = vcmp.lt.f32.partialorder %v354, 5.0
    %vm691 = vcmp.lt.f32.partialorder %v355, 5.0
    %vm692 = vcmp.lt.f32.partialorder %v356, 5.0
    %vm693 = vcmp.lt.f32.partialorder %v357, 5.0
    %vm694 = vcmp.lt.f32.partialorder %v358, 5.0
    %vm695 = vcmp.lt.f32.partialorder %v359, 5.0
    %vm696 = vcmp.lt.f32.partialorder %v360, 5.0
    %v697 = vsel %vm689, %v489, %v681
    %v698 = vsel %vm690, %v490, %v682
    %v699 = vsel %vm691, %v491, %v683
    %v700 = vsel %vm692, %v492, %v684
    %v701 = vsel %vm693, %v493, %v685
    %v702 = vsel %vm694, %v494, %v686
    %v703 = vsel %vm695, %v495, %v687
    %v704 = vsel %vm696, %v496, %v688
    %v705 = vmul.f32 %v697, %v305
    %v706 = vmul.f32 %v698, %v306
    %v707 = vmul.f32 %v699, %v307
    %v708 = vmul.f32 %v700, %v308
    %v709 = vmul.f32 %v701, %v309
    %v710 = vmul.f32 %v702, %v310
    %v711 = vmul.f32 %v703, %v311
    %v712 = vmul.f32 %v704, %v312
    %v713 = vmul.f32 %v705, 1.4142135
    %v714 = vmul.f32 %v706, 1.4142135
    %v715 = vmul.f32 %v707, 1.4142135
    %v716 = vmul.f32 %v708, 1.4142135
    %v717 = vmul.f32 %v709, 1.4142135
    %v718 = vmul.f32 %v710, 1.4142135
    %v719 = vmul.f32 %v711, 1.4142135
    %v720 = vmul.f32 %v712, 1.4142135
    %v721 = vshrl.u32 %v257, 8
    %v722 = vshrl.u32 %v258, 8
    %v723 = vshrl.u32 %v259, 8
    %v724 = vshrl.u32 %v260, 8
    %v725 = vshrl.u32 %v261, 8
    %v726 = vshrl.u32 %v262, 8
    %v727 = vshrl.u32 %v263, 8
    %v728 = vshrl.u32 %v264, 8
    %v729 = vcvt.s32.f32 %v721
    %v730 = vcvt.s32.f32 %v722
    %v731 = vcvt.s32.f32 %v723
    %v732 = vcvt.s32.f32 %v724
    %v733 = vcvt.s32.f32 %v725
    %v734 = vcvt.s32.f32 %v726
    %v735 = vcvt.s32.f32 %v727
    %v736 = vcvt.s32.f32 %v728
    %v737 = vadd.f32 %v729, 0.5
    %v738 = vadd.f32 %v730, 0.5
    %v739 = vadd.f32 %v731, 0.5
    %v740 = vadd.f32 %v732, 0.5
    %v741 = vadd.f32 %v733, 0.5
    %v742 = vadd.f32 %v734, 0.5
    %v743 = vadd.f32 %v735, 0.5
    %v744 = vadd.f32 %v736, 0.5
    %v745 = vmul.f32 %v737, 5.9604645e-08
    %v746 = vmul.f32 %v738, 5.9604645e-08
    %v747 = vmul.f32 %v739, 5.9604645e-08
    %v748 = vmul.f32 %v740, 5.9604645e-08
    %v749 = vmul.f32 %v741, 5.9604645e-08
    %v750 = vmul.f32 %v742, 5.9604645e-08
    %v751 = vmul.f32 %v743, 5.9604645e-08
    %v752 = vmul.f32 %v744, 5.9604645e-08
    %v753 = vmul.f32 %v745, 2.0
    %v754 = vmul.f32 %v746, 2.0
    %v755 = vmul.f32 %v747, 2.0
    %v756 = vmul.f32 %v748, 2.0
    %v757 = vmul.f32 %v749, 2.0
    %v758 = vmul.f32 %v750, 2.0
    %v759 = vmul.f32 %v751, 2.0
    %v760 = vmul.f32 %v752, 2.0
    %v761 = vsub.f32 %v753, 1.0
    %v762 = vsub.f32 %v754, 1.0
    %v763 = vsub.f32 %v755, 1.0
    %v764 = vsub.f32 %v756, 1.0
    %v765 = vsub.f32 %v757, 1.0
    %v766 = vsub.f32 %v758, 1.0
    %v767 = vsub.f32 %v759, 1.0
    %v768 = vsub.f32 %v760, 1.0
    %v769 = vsub.f32 1.0, %v761
    %v770 = vsub.f32 1.0, %v762
    %v771 = vsub.f32 1.0, %v763
    %v772 = vsub.f32 1.0, %v764
    %v773 = vsub.f32 1.0, %v765
    %v774 = vsub.f32 1.0, %v766
    %v775 = vsub.f32 1.0, %v767
    %v776 = vsub.f32 1.0, %v768
    %v777 = vadd.f32 %v761, 1.0
    %v778 = vadd.f32 %v762, 1.0
    %v779 = vadd.f32 %v763, 1.0
    %v780 = vadd.f32 %v764, 1.0
    %v781 = vadd.f32 %v765, 1.0
    %v782 = vadd.f32 %v766, 1.0
    %v783 = vadd.f32 %v767, 1.0
    %v784 = vadd.f32 %v768, 1.0
    %v785 = vmul.f32 %v769, %v777
    %v786 = vmul.f32 %v770, %v778
    %v787 = vmul.f32 %v771, %v779
    %v788 = vmul.f32 %v772, %v780
    %v789 = vmul.f32 %v773, %v781
    %v790 = vmul.f32 %v774, %v782
    %v791 = vmul.f32 %v775, %v783
    %v792 = vmul.f32 %v776, %v784
    %v793 = vlog2.pop %v785
    %v794 = vmul.f32 %v793, 0.6931472
    %v795 = vlog2.pop %v786
    %v796 = vmul.f32 %v795, 0.6931472
    %v797 = vlog2.pop %v787
    %v798 = vmul.f32 %v797, 0.6931472
    %v799 = vlog2.pop %v788
    %v800 = vmul.f32 %v799, 0.6931472
    %v801 = vlog2.pop %v789
    %v802 = vmul.f32 %v801, 0.6931472
    %v803 = vlog2.pop %v790
    %v804 = vmul.f32 %v803, 0.6931472
    %v805 = vlog2.pop %v791
    %v806 = vmul.f32 %v805, 0.6931472
    %v807 = vlog2.pop %v792
    %v808 = vmul.f32 %v807, 0.6931472
    %v809 = vsub.f32 0.0, %v794
    %v810 = vsub.f32 0.0, %v796
    %v811 = vsub.f32 0.0, %v798
    %v812 = vsub.f32 0.0, %v800
    %v813 = vsub.f32 0.0, %v802
    %v814 = vsub.f32 0.0, %v804
    %v815 = vsub.f32 0.0, %v806
    %v816 = vsub.f32 0.0, %v808
    %v817 = vsub.f32 %v809, 2.5
    %v818 = vsub.f32 %v810, 2.5
    %v819 = vsub.f32 %v811, 2.5
    %v820 = vsub.f32 %v812, 2.5
    %v821 = vsub.f32 %v813, 2.5
    %v822 = vsub.f32 %v814, 2.5
    %v823 = vsub.f32 %v815, 2.5
    %v824 = vsub.f32 %v816, 2.5
    %v825 = vmul.f32 %v817, 2.8102264e-08
    %v826 = vmul.f32 %v818, 2.8102264e-08
    %v827 = vmul.f32 %v819, 2.8102264e-08
    %v828 = vmul.f32 %v820, 2.8102264e-08
    %v829 = vmul.f32 %v821, 2.8102264e-08
    %v830 = vmul.f32 %v822, 2.8102264e-08
    %v831 = vmul.f32 %v823, 2.8102264e-08
    %v832 = vmul.f32 %v824, 2.8102264e-08
    %v833 = vadd.f32 %v825, 3.4327394e-07
    %v834 = vadd.f32 %v826, 3.4327394e-07
    %v835 = vadd.f32 %v827, 3.4327394e-07
    %v836 = vadd.f32 %v828, 3.4327394e-07
    %v837 = vadd.f32 %v829, 3.4327394e-07
    %v838 = vadd.f32 %v830, 3.4327394e-07
    %v839 = vadd.f32 %v831, 3.4327394e-07
    %v840 = vadd.f32 %v832, 3.4327394e-07
    %v841 = vmul.f32 %v833, %v817
    %v842 = vmul.f32 %v834, %v818
    %v843 = vmul.f32 %v835, %v819
    %v844 = vmul.f32 %v836, %v820
    %v845 = vmul.f32 %v837, %v821
    %v846 = vmul.f32 %v838, %v822
    %v847 = vmul.f32 %v839, %v823
    %v848 = vmul.f32 %v840, %v824
    %v849 = vadd.f32 %v841, -3.5233877e-06
    %v850 = vadd.f32 %v842, -3.5233877e-06
    %v851 = vadd.f32 %v843, -3.5233877e-06
    %v852 = vadd.f32 %v844, -3.5233877e-06
    %v853 = vadd.f32 %v845, -3.5233877e-06
    %v854 = vadd.f32 %v846, -3.5233877e-06
    %v855 = vadd.f32 %v847, -3.5233877e-06
    %v856 = vadd.f32 %v848, -3.5233877e-06
    %v857 = vmul.f32 %v849, %v817
    %v858 = vmul.f32 %v850, %v818
    %v859 = vmul.f32 %v851, %v819
    %v860 = vmul.f32 %v852, %v820
    %v861 = vmul.f32 %v853, %v821
    %v862 = vmul.f32 %v854, %v822
    %v863 = vmul.f32 %v855, %v823
    %v864 = vmul.f32 %v856, %v824
    %v865 = vadd.f32 %v857, -4.3915065e-06
    %v866 = vadd.f32 %v858, -4.3915065e-06
    %v867 = vadd.f32 %v859, -4.3915065e-06
    %v868 = vadd.f32 %v860, -4.3915065e-06
    %v869 = vadd.f32 %v861, -4.3915065e-06
    %v870 = vadd.f32 %v862, -4.3915065e-06
    %v871 = vadd.f32 %v863, -4.3915065e-06
    %v872 = vadd.f32 %v864, -4.3915065e-06
    %v873 = vmul.f32 %v865, %v817
    %v874 = vmul.f32 %v866, %v818
    %v875 = vmul.f32 %v867, %v819
    %v876 = vmul.f32 %v868, %v820
    %v877 = vmul.f32 %v869, %v821
    %v878 = vmul.f32 %v870, %v822
    %v879 = vmul.f32 %v871, %v823
    %v880 = vmul.f32 %v872, %v824
    %v881 = vadd.f32 %v873, 0.00021858087
    %v882 = vadd.f32 %v874, 0.00021858087
    %v883 = vadd.f32 %v875, 0.00021858087
    %v884 = vadd.f32 %v876, 0.00021858087
    %v885 = vadd.f32 %v877, 0.00021858087
    %v886 = vadd.f32 %v878, 0.00021858087
    %v887 = vadd.f32 %v879, 0.00021858087
    %v888 = vadd.f32 %v880, 0.00021858087
    %v889 = vmul.f32 %v881, %v817
    %v890 = vmul.f32 %v882, %v818
    %v891 = vmul.f32 %v883, %v819
    %v892 = vmul.f32 %v884, %v820
    %v893 = vmul.f32 %v885, %v821
    %v894 = vmul.f32 %v886, %v822
    %v895 = vmul.f32 %v887, %v823
    %v896 = vmul.f32 %v888, %v824
    %v897 = vadd.f32 %v889, -0.001253725
    %v898 = vadd.f32 %v890, -0.001253725
    %v899 = vadd.f32 %v891, -0.001253725
    %v900 = vadd.f32 %v892, -0.001253725
    %v901 = vadd.f32 %v893, -0.001253725
    %v902 = vadd.f32 %v894, -0.001253725
    %v903 = vadd.f32 %v895, -0.001253725
    %v904 = vadd.f32 %v896, -0.001253725
    %v905 = vmul.f32 %v897, %v817
    %v906 = vmul.f32 %v898, %v818
    %v907 = vmul.f32 %v899, %v819
    %v908 = vmul.f32 %v900, %v820
    %v909 = vmul.f32 %v901, %v821
    %v910 = vmul.f32 %v902, %v822
    %v911 = vmul.f32 %v903, %v823
    %v912 = vmul.f32 %v904, %v824
    %v913 = vadd.f32 %v905, -0.0041776816
    %v914 = vadd.f32 %v906, -0.0041776816
    %v915 = vadd.f32 %v907, -0.0041776816
    %v916 = vadd.f32 %v908, -0.0041776816
    %v917 = vadd.f32 %v909, -0.0041776816
    %v918 = vadd.f32 %v910, -0.0041776816
    %v919 = vadd.f32 %v911, -0.0041776816
    %v920 = vadd.f32 %v912, -0.0041776816
    %v921 = vmul.f32 %v913, %v817
    %v922 = vmul.f32 %v914, %v818
    %v923 = vmul.f32 %v915, %v819
    %v924 = vmul.f32 %v916, %v820
    %v925 = vmul.f32 %v917, %v821
    %v926 = vmul.f32 %v918, %v822
    %v927 = vmul.f32 %v919, %v823
    %v928 = vmul.f32 %v920, %v824
    %v929 = vadd.f32 %v921, 0.24664073
    %v930 = vadd.f32 %v922, 0.24664073
    %v931 = vadd.f32 %v923, 0.24664073
    %v932 = vadd.f32 %v924, 0.24664073
    %v933 = vadd.f32 %v925, 0.24664073
    %v934 = vadd.f32 %v926, 0.24664073
    %v935 = vadd.f32 %v927, 0.24664073
    %v936 = vadd.f32 %v928, 0.24664073
    %v937 = vmul.f32 %v929, %v817
    %v938 = vmul.f32 %v930, %v818
    %v939 = vmul.f32 %v931, %v819
    %v940 = vmul.f32 %v932, %v820
    %v941 = vmul.f32 %v933, %v821
    %v942 = vmul.f32 %v934, %v822
    %v943 = vmul.f32 %v935, %v823
    %v944 = vmul.f32 %v936, %v824
    %v945 = vadd.f32 %v937, 1.5014094
    %v946 = vadd.f32 %v938, 1.5014094
    %v947 = vadd.f32 %v939, 1.5014094
    %v948 = vadd.f32 %v940, 1.5014094
    %v949 = vadd.f32 %v941, 1.5014094
    %v950 = vadd.f32 %v942, 1.5014094
    %v951 = vadd.f32 %v943, 1.5014094
    %v952 = vadd.f32 %v944, 1.5014094
    %v953 = vrsqrt.pop %v809
    %v954 = vmul.f32 %v809, %v953
    %vm955 = vcmp.eq.f32.partialorder %v809, inf
    %v956 = vsel %vm955, %v809, %v954
    %vm957 = vcmp.eq.f32.partialorder %v809, 0.0
    %v958 = vand.u32 %v809, 2147483648
    %v959 = vsel %vm957, %v958, %v956
    %v960 = vrsqrt.pop %v810
    %v961 = vmul.f32 %v810, %v960
    %vm962 = vcmp.eq.f32.partialorder %v810, inf
    %v963 = vsel %vm962, %v810, %v961
    %vm964 = vcmp.eq.f32.partialorder %v810, 0.0
    %v965 = vand.u32 %v810, 2147483648
    %v966 = vsel %vm964, %v965, %v963
    %v967 = vrsqrt.pop %v811
    %v968 = vmul.f32 %v811, %v967
    %vm969 = vcmp.eq.f32.partialorder %v811, inf
    %v970 = vsel %vm969, %v811, %v968
    %vm971 = vcmp.eq.f32.partialorder %v811, 0.0
    %v972 = vand.u32 %v811, 2147483648
    %v973 = vsel %vm971, %v972, %v970
    %v974 = vrsqrt.pop %v812
    %v975 = vmul.f32 %v812, %v974
    %vm976 = vcmp.eq.f32.partialorder %v812, inf
    %v977 = vsel %vm976, %v812, %v975
    %vm978 = vcmp.eq.f32.partialorder %v812, 0.0
    %v979 = vand.u32 %v812, 2147483648
    %v980 = vsel %vm978, %v979, %v977
    %v981 = vrsqrt.pop %v813
    %v982 = vmul.f32 %v813, %v981
    %vm983 = vcmp.eq.f32.partialorder %v813, inf
    %v984 = vsel %vm983, %v813, %v982
    %vm985 = vcmp.eq.f32.partialorder %v813, 0.0
    %v986 = vand.u32 %v813, 2147483648
    %v987 = vsel %vm985, %v986, %v984
    %v988 = vrsqrt.pop %v814
    %v989 = vmul.f32 %v814, %v988
    %vm990 = vcmp.eq.f32.partialorder %v814, inf
    %v991 = vsel %vm990, %v814, %v989
    %vm992 = vcmp.eq.f32.partialorder %v814, 0.0
    %v993 = vand.u32 %v814, 2147483648
    %v994 = vsel %vm992, %v993, %v991
    %v995 = vrsqrt.pop %v815
    %v996 = vmul.f32 %v815, %v995
    %vm997 = vcmp.eq.f32.partialorder %v815, inf
    %v998 = vsel %vm997, %v815, %v996
    %vm999 = vcmp.eq.f32.partialorder %v815, 0.0
    %v1000 = vand.u32 %v815, 2147483648
    %v1001 = vsel %vm999, %v1000, %v998
    %v1002 = vrsqrt.pop %v816
    %v1003 = vmul.f32 %v816, %v1002
    %vm1004 = vcmp.eq.f32.partialorder %v816, inf
    %v1005 = vsel %vm1004, %v816, %v1003
    %vm1006 = vcmp.eq.f32.partialorder %v816, 0.0
    %v1007 = vand.u32 %v816, 2147483648
    %v1008 = vsel %vm1006, %v1007, %v1005
    %v1009 = vsub.f32 %v959, 3.0
    %v1010 = vsub.f32 %v966, 3.0
    %v1011 = vsub.f32 %v973, 3.0
    %v1012 = vsub.f32 %v980, 3.0
    %v1013 = vsub.f32 %v987, 3.0
    %v1014 = vsub.f32 %v994, 3.0
    %v1015 = vsub.f32 %v1001, 3.0
    %v1016 = vsub.f32 %v1008, 3.0
    %v1017 = vmul.f32 %v1009, -0.00020021426
    %v1018 = vmul.f32 %v1010, -0.00020021426
    %v1019 = vmul.f32 %v1011, -0.00020021426
    %v1020 = vmul.f32 %v1012, -0.00020021426
    %v1021 = vmul.f32 %v1013, -0.00020021426
    %v1022 = vmul.f32 %v1014, -0.00020021426
    %v1023 = vmul.f32 %v1015, -0.00020021426
    %v1024 = vmul.f32 %v1016, -0.00020021426
    %v1025 = vadd.f32 %v1017, 0.00010095056
    %v1026 = vadd.f32 %v1018, 0.00010095056
    %v1027 = vadd.f32 %v1019, 0.00010095056
    %v1028 = vadd.f32 %v1020, 0.00010095056
    %v1029 = vadd.f32 %v1021, 0.00010095056
    %v1030 = vadd.f32 %v1022, 0.00010095056
    %v1031 = vadd.f32 %v1023, 0.00010095056
    %v1032 = vadd.f32 %v1024, 0.00010095056
    %v1033 = vmul.f32 %v1025, %v1009
    %v1034 = vmul.f32 %v1026, %v1010
    %v1035 = vmul.f32 %v1027, %v1011
    %v1036 = vmul.f32 %v1028, %v1012
    %v1037 = vmul.f32 %v1029, %v1013
    %v1038 = vmul.f32 %v1030, %v1014
    %v1039 = vmul.f32 %v1031, %v1015
    %v1040 = vmul.f32 %v1032, %v1016
    %v1041 = vadd.f32 %v1033, 0.0013493432
    %v1042 = vadd.f32 %v1034, 0.0013493432
    %v1043 = vadd.f32 %v1035, 0.0013493432
    %v1044 = vadd.f32 %v1036, 0.0013493432
    %v1045 = vadd.f32 %v1037, 0.0013493432
    %v1046 = vadd.f32 %v1038, 0.0013493432
    %v1047 = vadd.f32 %v1039, 0.0013493432
    %v1048 = vadd.f32 %v1040, 0.0013493432
    %v1049 = vmul.f32 %v1041, %v1009
    %v1050 = vmul.f32 %v1042, %v1010
    %v1051 = vmul.f32 %v1043, %v1011
    %v1052 = vmul.f32 %v1044, %v1012
    %v1053 = vmul.f32 %v1045, %v1013
    %v1054 = vmul.f32 %v1046, %v1014
    %v1055 = vmul.f32 %v1047, %v1015
    %v1056 = vmul.f32 %v1048, %v1016
    %v1057 = vadd.f32 %v1049, -0.0036734284
    %v1058 = vadd.f32 %v1050, -0.0036734284
    %v1059 = vadd.f32 %v1051, -0.0036734284
    %v1060 = vadd.f32 %v1052, -0.0036734284
    %v1061 = vadd.f32 %v1053, -0.0036734284
    %v1062 = vadd.f32 %v1054, -0.0036734284
    %v1063 = vadd.f32 %v1055, -0.0036734284
    %v1064 = vadd.f32 %v1056, -0.0036734284
    %v1065 = vmul.f32 %v1057, %v1009
    %v1066 = vmul.f32 %v1058, %v1010
    %v1067 = vmul.f32 %v1059, %v1011
    %v1068 = vmul.f32 %v1060, %v1012
    %v1069 = vmul.f32 %v1061, %v1013
    %v1070 = vmul.f32 %v1062, %v1014
    %v1071 = vmul.f32 %v1063, %v1015
    %v1072 = vmul.f32 %v1064, %v1016
    %v1073 = vadd.f32 %v1065, 0.0057395077
    %v1074 = vadd.f32 %v1066, 0.0057395077
    %v1075 = vadd.f32 %v1067, 0.0057395077
    %v1076 = vadd.f32 %v1068, 0.0057395077
    %v1077 = vadd.f32 %v1069, 0.0057395077
    %v1078 = vadd.f32 %v1070, 0.0057395077
    %v1079 = vadd.f32 %v1071, 0.0057395077
    %v1080 = vadd.f32 %v1072, 0.0057395077
    %v1081 = vmul.f32 %v1073, %v1009
    %v1082 = vmul.f32 %v1074, %v1010
    %v1083 = vmul.f32 %v1075, %v1011
    %v1084 = vmul.f32 %v1076, %v1012
    %v1085 = vmul.f32 %v1077, %v1013
    %v1086 = vmul.f32 %v1078, %v1014
    %v1087 = vmul.f32 %v1079, %v1015
    %v1088 = vmul.f32 %v1080, %v1016
    %v1089 = vadd.f32 %v1081, -0.0076224613
    %v1090 = vadd.f32 %v1082, -0.0076224613
    %v1091 = vadd.f32 %v1083, -0.0076224613
    %v1092 = vadd.f32 %v1084, -0.0076224613
    %v1093 = vadd.f32 %v1085, -0.0076224613
    %v1094 = vadd.f32 %v1086, -0.0076224613
    %v1095 = vadd.f32 %v1087, -0.0076224613
    %v1096 = vadd.f32 %v1088, -0.0076224613
    %v1097 = vmul.f32 %v1089, %v1009
    %v1098 = vmul.f32 %v1090, %v1010
    %v1099 = vmul.f32 %v1091, %v1011
    %v1100 = vmul.f32 %v1092, %v1012
    %v1101 = vmul.f32 %v1093, %v1013
    %v1102 = vmul.f32 %v1094, %v1014
    %v1103 = vmul.f32 %v1095, %v1015
    %v1104 = vmul.f32 %v1096, %v1016
    %v1105 = vadd.f32 %v1097, 0.0094388705
    %v1106 = vadd.f32 %v1098, 0.0094388705
    %v1107 = vadd.f32 %v1099, 0.0094388705
    %v1108 = vadd.f32 %v1100, 0.0094388705
    %v1109 = vadd.f32 %v1101, 0.0094388705
    %v1110 = vadd.f32 %v1102, 0.0094388705
    %v1111 = vadd.f32 %v1103, 0.0094388705
    %v1112 = vadd.f32 %v1104, 0.0094388705
    %v1113 = vmul.f32 %v1105, %v1009
    %v1114 = vmul.f32 %v1106, %v1010
    %v1115 = vmul.f32 %v1107, %v1011
    %v1116 = vmul.f32 %v1108, %v1012
    %v1117 = vmul.f32 %v1109, %v1013
    %v1118 = vmul.f32 %v1110, %v1014
    %v1119 = vmul.f32 %v1111, %v1015
    %v1120 = vmul.f32 %v1112, %v1016
    %v1121 = vadd.f32 %v1113, 1.001674
    %v1122 = vadd.f32 %v1114, 1.001674
    %v1123 = vadd.f32 %v1115, 1.001674
    %v1124 = vadd.f32 %v1116, 1.001674
    %v1125 = vadd.f32 %v1117, 1.001674
    %v1126 = vadd.f32 %v1118, 1.001674
    %v1127 = vadd.f32 %v1119, 1.001674
    %v1128 = vadd.f32 %v1120, 1.001674
    %v1129 = vmul.f32 %v1121, %v1009
    %v1130 = vmul.f32 %v1122, %v1010
    %v1131 = vmul.f32 %v1123, %v1011
    %v1132 = vmul.f32 %v1124, %v1012
    %v1133 = vmul.f32 %v1125, %v1013
    %v1134 = vmul.f32 %v1126, %v1014
    %v1135 = vmul.f32 %v1127, %v1015
    %v1136 = vmul.f32 %v1128, %v1016
    %v1137 = vadd.f32 %v1129, 2.8329768
    %v1138 = vadd.f32 %v1130, 2.8329768
    %v1139 = vadd.f32 %v1131, 2.8329768
    %v1140 = vadd.f32 %v1132, 2.8329768
    %v1141 = vadd.f32 %v1133, 2.8329768
    %v1142 = vadd.f32 %v1134, 2.8329768
    %v1143 = vadd.f32 %v1135, 2.8329768
    %v1144 = vadd.f32 %v1136, 2.8329768
    %vm1145 = vcmp.lt.f32.partialorder %v809, 5.0
    %vm1146 = vcmp.lt.f32.partialorder %v810, 5.0
    %vm1147 = vcmp.lt.f32.partialorder %v811, 5.0
    %vm1148 = vcmp.lt.f32.partialorder %v812, 5.0
    %vm1149 = vcmp.lt.f32.partialorder %v813, 5.0
    %vm1150 = vcmp.lt.f32.partialorder %v814, 5.0
    %vm1151 = vcmp.lt.f32.partialorder %v815, 5.0
    %vm1152 = vcmp.lt.f32.partialorder %v816, 5.0
    %v1153 = vsel %vm1145, %v945, %v1137
    %v1154 = vsel %vm1146, %v946, %v1138
    %v1155 = vsel %vm1147, %v947, %v1139
    %v1156 = vsel %vm1148, %v948, %v1140
    %v1157 = vsel %vm1149, %v949, %v1141
    %v1158 = vsel %vm1150, %v950, %v1142
    %v1159 = vsel %vm1151, %v951, %v1143
    %v1160 = vsel %vm1152, %v952, %v1144
    %v1161 = vmul.f32 %v1153, %v761
    %v1162 = vmul.f32 %v1154, %v762
    %v1163 = vmul.f32 %v1155, %v763
    %v1164 = vmul.f32 %v1156, %v764
    %v1165 = vmul.f32 %v1157, %v765
    %v1166 = vmul.f32 %v1158, %v766
    %v1167 = vmul.f32 %v1159, %v767
    %v1168 = vmul.f32 %v1160, %v768
    %v1169 = vmul.f32 %v1161, 1.4142135
    %v1170 = vmul.f32 %v1162, 1.4142135
    %v1171 = vmul.f32 %v1163, 1.4142135
    %v1172 = vmul.f32 %v1164, 1.4142135
    %v1173 = vmul.f32 %v1165, 1.4142135
    %v1174 = vmul.f32 %v1166, 1.4142135
    %v1175 = vmul.f32 %v1167, 1.4142135
    %v1176 = vmul.f32 %v1168, 1.4142135
    %v1177 = vmul.f32 %v1169, 0.2236068
    %v1178 = vmul.f32 %v1170, 0.2236068
    %v1179 = vmul.f32 %v1171, 0.2236068
    %v1180 = vmul.f32 %v1172, 0.2236068
    %v1181 = vmul.f32 %v1173, 0.2236068
    %v1182 = vmul.f32 %v1174, 0.2236068
    %v1183 = vmul.f32 %v1175, 0.2236068
    %v1184 = vmul.f32 %v1176, 0.2236068
    %v1185 = vld [vmem:[#allocation4] sm:$0xff]
    %v1186 = vld [vmem:[#allocation4 + $0x8] sm:$0xff]
    %v1189 = vcombine.high %v1185, %v1185
    %v1191 = vunpack.c.l.s4 1983009808
    %v1192 = vunpack.c.0.s8 %v1191
    %v1193 = vlaneseq
    %v1194 = vshrl.u32 %v1193, 7
    %v1195 = vsub.s32 %v1192, %v1194
    %v1196 = vrot.slane %v1185, %v1195
    %v1198 = vunpack.c.l.s4 1983009808
    %v1199 = vunpack.c.0.s8 %v1198
    %v1200 = vlaneseq
    %v1201 = vshrl.u32 %v1200, 7
    %v1202 = vsub.s32 %v1199, %v1201
    %v1203 = vrot.slane %v1189, %v1202
    %v1204 = vcombine.high %v1196, %v1196
    %v1205 = vcombine.high %v1203, %v1203
    %v1206 = vcombine.high %v1186, %v1186
    %v1208 = vunpack.c.l.s4 1983009808
    %v1209 = vunpack.c.0.s8 %v1208
    %v1210 = vlaneseq
    %v1211 = vshrl.u32 %v1210, 7
    %v1212 = vsub.s32 %v1209, %v1211
    %v1213 = vrot.slane %v1186, %v1212
    %v1215 = vunpack.c.l.s4 1983009808
    %v1216 = vunpack.c.0.s8 %v1215
    %v1217 = vlaneseq
    %v1218 = vshrl.u32 %v1217, 7
    %v1219 = vsub.s32 %v1216, %v1218
    %v1220 = vrot.slane %v1206, %v1219
    %v1221 = vcombine.high %v1213, %v1213
    %v1222 = vcombine.high %v1220, %v1220
    %v1231 = vmul.f32 %v713, %v1196
    %v1232 = vmul.f32 %v714, %v1204
    %v1233 = vmul.f32 %v715, %v1203
    %v1234 = vmul.f32 %v716, %v1205
    %v1235 = vmul.f32 %v717, %v1213
    %v1236 = vmul.f32 %v718, %v1221
    %v1237 = vmul.f32 %v719, %v1220
    %v1238 = vmul.f32 %v720, %v1222
    %v1239 = vadd.f32 %v1231, %v1177
    %v1240 = vadd.f32 %v1232, %v1178
    %v1241 = vadd.f32 %v1233, %v1179
    %v1242 = vadd.f32 %v1234, %v1180
    %v1243 = vadd.f32 %v1235, %v1181
    %v1244 = vadd.f32 %v1236, %v1182
    %v1245 = vadd.f32 %v1237, %v1183
    %v1246 = vadd.f32 %v1238, %v1184
    %v1247 = vadd.f32 %v713, 1e-05
    %v1248 = vadd.f32 %v714, 1e-05
    %v1249 = vadd.f32 %v715, 1e-05
    %v1250 = vadd.f32 %v716, 1e-05
    %v1251 = vadd.f32 %v717, 1e-05
    %v1252 = vadd.f32 %v718, 1e-05
    %v1253 = vadd.f32 %v719, 1e-05
    %v1254 = vadd.f32 %v720, 1e-05
    %v1255 = vrcp.pop %v1247
    %v1256 = vmul.f32 %v1239, %v1255
    %v1257 = vrcp.pop %v1248
    %v1258 = vmul.f32 %v1240, %v1257
    %v1259 = vrcp.pop %v1249
    %v1260 = vmul.f32 %v1241, %v1259
    %v1261 = vrcp.pop %v1250
    %v1262 = vmul.f32 %v1242, %v1261
    %v1263 = vrcp.pop %v1251
    %v1264 = vmul.f32 %v1243, %v1263
    %v1265 = vrcp.pop %v1252
    %v1266 = vmul.f32 %v1244, %v1265
    %v1267 = vrcp.pop %v1253
    %v1268 = vmul.f32 %v1245, %v1267
    %v1269 = vrcp.pop %v1254
    %v1270 = vmul.f32 %v1246, %v1269
    %v1279 = vcombine.low %v1256, %v1258
    %v1280 = vcombine.low %v1260, %v1262
    %v1282 = vunpack.c.l.s4 1983009808
    %v1283 = vunpack.c.0.s8 %v1282
    %v1284 = vlaneseq
    %v1285 = vshrl.u32 %v1284, 7
    %v1286 = vsub.s32 %v1283, %v1285
    %v1287 = vrot.slane %v1279, %v1286
    %v1289 = vunpack.c.l.s4 1983009808
    %v1290 = vunpack.c.0.s8 %v1289
    %v1291 = vlaneseq
    %v1292 = vshrl.u32 %v1291, 7
    %v1293 = vsub.s32 %v1290, %v1292
    %v1294 = vrot.slane %v1280, %v1293
    %v1295 = vcombine.low %v1287, %v1294
    %v1296 = vcombine.low %v1264, %v1266
    %v1297 = vcombine.low %v1268, %v1270
    %v1299 = vunpack.c.l.s4 1983009808
    %v1300 = vunpack.c.0.s8 %v1299
    %v1301 = vlaneseq
    %v1302 = vshrl.u32 %v1301, 7
    %v1303 = vsub.s32 %v1300, %v1302
    %v1304 = vrot.slane %v1296, %v1303
    %v1306 = vunpack.c.l.s4 1983009808
    %v1307 = vunpack.c.0.s8 %v1306
    %v1308 = vlaneseq
    %v1309 = vshrl.u32 %v1308, 7
    %v1310 = vsub.s32 %v1307, %v1309
    %v1311 = vrot.slane %v1297, %v1310
    %v1312 = vcombine.low %v1304, %v1311
    %1315 = vst [vmem:[#allocation7] sm:$0xff] %v1295
    %1316 = vst [vmem:[#allocation7 + $0x8] sm:$0xff] %v1312
    // Predicated region
    $region10: #{tpu_custom_call.1} parent=1 // pred_check
      _
    $region11: #{tpu_custom_call.1} parent=1 // pred_check_branch
      %1318 = sbr.rel (0) target = $region13
    $region12: #{tpu_custom_call.1} parent=1 // pred_region
      %s1320 = ssub.s32 256, 256
      %1321 = vsyncadd [#allocation6], %s1320
      %s1323 = sshll.u32 [#allocation7], 4
      %s1324 = int_to_ptr.vmem [resolvable:$true] %s1323
      %1326 = dma.vmem_to_hbm [thread:$0]  %s1324, 256, %s2, [#allocation6]
    $region13: #{tpu_custom_call.1} parent=1 // pred_fallthru
      _
    // Predicated region
    $region14: #{tpu_custom_call.1} parent=1 // pred_check
      _
    $region15: #{tpu_custom_call.1} parent=1 // pred_check_branch
      %1328 = sbr.rel (0) target = $region17
    $region16: #{tpu_custom_call.1} parent=1 // pred_region
      %1329 = dma.done [#allocation6], 256
    $region17: #{tpu_custom_call.1} parent=1 // pred_fallthru
      _
    %1330 = vsyncpa [#allocation5], 1
    %1331 = vsyncpa [#allocation6], 1

</llo_original>
